<compile_context>
chip_gen: v7x
topology: tpu7x:2x2x1
jax: 0.10.0
libtpu: 0.0.40
codegen_flags: <defaults>
</compile_context>

<pallas_src>
import functools

import jax
import jax.numpy as jnp
from jax.experimental import pallas as pl
from jax.experimental.pallas import tpu as pltpu

LEAKY_SLOPE = 0.01  # nn.LeakyReLU default negative_slope


def _leaky_relu(x):
    # max(x, slope*x): 2 VALU ops instead of compare+select+mul.
    return jnp.maximum(x, LEAKY_SLOPE * x)


# ------------------------------ fused kernel ------------------------------ #

def _tcn_fused_kernel(*refs, layers_meta, seq_len):
    """Whole TCN for one batch-chunk; activations resident in VMEM/vregs.

    refs = [x_ref, per-layer (w1, b1, w2, b2[, wd, bd]) ..., o_ref]
      x_ref : (chunk, C_in, L)    input dtype
      w1    : (K, C_out, C_in)    bf16   (tap k on the leading axis)
      b1    : (C_out, 1)          f32
      w2    : (K, C_out, C_out)   bf16
      b2    : (C_out, 1)          f32
      wd    : (C_out, C_in)       bf16   (1x1 downsample, only if C_in != C_out)
      bd    : (C_out, 1)          f32
      o_ref : (chunk, C_last, L)  output dtype

    Layout (chunk, C, L): L (multiple of 128) on lanes, C on sublanes -- no
    batch-fold transposes are needed in HBM or in VMEM.
    """
    x_ref, o_ref = refs[0], refs[-1]
    wrefs = refs[1:-1]
    chunk = x_ref.shape[0]

    # Lane-position row built once; causal masks cached per shift amount.
    lane = jax.lax.broadcasted_iota(jnp.int32, (1, 1, seq_len), 2)
    mask_cache = {}

    def causal_shift(a, s):
        # shifted[..., t] = a[..., t - s] for t >= s, else 0   (f32 in/out)
        if s == 0:
            return a
        if s >= seq_len:
            return jnp.zeros_like(a)
        if s not in mask_cache:
            mask_cache[s] = lane >= s
        rolled = pltpu.roll(a, shift=s, axis=2)         # XLU lane rotate
        return jnp.where(mask_cache[s], rolled, 0.0)    # zero wrapped region

    def conv(h, w_ref, b_ref, d, ksize):
        """Dilated causal conv as K accumulating batched MXU matmuls.

        h: f32 (chunk, C, L)  ->  f32 (chunk, O, L)
        """
        acc = None
        for k in range(ksize):
            op = causal_shift(h, (ksize - 1 - k) * d).astype(jnp.bfloat16)
            wb = jnp.broadcast_to(w_ref[k], (chunk,) + w_ref.shape[1:])
            t = jnp.einsum("boc,bcl->bol", wb, op,
                           preferred_element_type=jnp.float32)
            acc = t if acc is None else acc + t
        return acc + b_ref[...][None]                   # (1, O, 1) bias

    h = x_ref[...].astype(jnp.float32)                  # resident activations
    wi = 0
    for meta in layers_meta:
        d = meta["dilation"]
        ksize = meta["kernel_size"]
        has_ds = meta["has_downsample"]

        w1, b1, w2, b2 = (wrefs[wi], wrefs[wi + 1],
                          wrefs[wi + 2], wrefs[wi + 3])
        wi += 4

        h1 = _leaky_relu(conv(h, w1, b1, d, ksize))     # dropout1 = identity
        h2 = _leaky_relu(conv(h1, w2, b2, d, ksize))    # dropout2 = identity

        if has_ds:                                      # 1x1 residual proj
            wd, bd = wrefs[wi], wrefs[wi + 1]
            wi += 2
            wdb = jnp.broadcast_to(wd[...], (chunk,) + wd.shape)
            res = jnp.einsum("boc,bcl->bol", wdb, h.astype(jnp.bfloat16),
                             preferred_element_type=jnp.float32)
            res = res + bd[...][None]
        else:
            res = h

        h = _leaky_relu(h2 + res)

    o_ref[...] = h.astype(o_ref.dtype)


# --------------------------------- wrapper --------------------------------- #

def _pick_chunk(batch, per_batch_bytes, vmem_budget_bytes, min_grid):
    """Largest batch-chunk per grid step that fits the VMEM budget while
    keeping at least `min_grid` grid steps (so both v7x TensorCores get work
    through the 'parallel' grid axis)."""
    max_chunk = max(1, vmem_budget_bytes // max(per_batch_bytes, 1))
    want = -(-batch // max(min_grid, 1))      # ceil(batch / min_grid)
    return max(1, min(max_chunk, want))


def temporal_conv_net(x, packed, out_dtype=jnp.float32):
    """Forward pass of TemporalConvNet.  x: (B, C_in, L)."""
    B, C_in, L = x.shape
    layers_meta = tuple(p["meta"] for p in packed)
    c_out = packed[-1]["c_out"]
    c_max = max([C_in] + [p["c_out"] for p in packed])

    # Conservative live-VMEM estimate per batch element per grid step:
    # double-buffered in/out blocks + ~a dozen live f32 activation temporaries.
    per_b = L * 4 * (2 * C_in + 2 * c_out + 12 * c_max)
    min_grid = 2 if B >= 2 else 1             # keep both v7x TCs busy
    chunk = _pick_chunk(B, per_b, 10 * 1024 * 1024, min_grid)
    G = -(-B // chunk)
    B_p = G * chunk
    if B_p != B:                              # pad awkward (e.g. prime) batches
        x = jnp.pad(x, ((0, B_p - B), (0, 0), (0, 0)))

    # TODO(synk): for very long L * wide channels (per_b > budget even at
    # chunk=1) the sequence itself would need tiling with a receptive-field
    # halo; not required at these sizes.

    in_specs = [pl.BlockSpec((chunk, C_in, L), lambda g: (g, 0, 0))]
    args = [x]
    for p in packed:
        names = ["w1", "b1", "w2", "b2"]
        if p["meta"]["has_downsample"]:
            names += ["wd", "bd"]
        for name in names:
            a = p[name]
            in_specs.append(
                pl.BlockSpec(a.shape, lambda g, nd=a.ndim: (0,) * nd))
            args.append(a)

    kern = functools.partial(_tcn_fused_kernel,
                             layers_meta=layers_meta, seq_len=L)

    out = pl.pallas_call(
        kern,
        out_shape=jax.ShapeDtypeStruct((B_p, c_out, L), out_dtype),
        grid=(G,),
        in_specs=in_specs,
        out_specs=pl.BlockSpec((chunk, c_out, L), lambda g: (g, 0, 0)),
        compiler_params=pltpu.CompilerParams(
            dimension_semantics=("parallel",),
            vmem_limit_bytes=32 * 1024 * 1024),
    )(*args)

    return out[:B] if B_p != B else out


# ----------------------------- parameter setup ----------------------------- #

def _weight_norm(v, g):
    """PyTorch weight_norm (dim=0) for Conv1d weight v:(C_out, C_in, K)."""
    norm = jnp.sqrt(jnp.sum(v * v, axis=(1, 2), keepdims=True))
    return g[:, None, None] * v / norm


def init_tcn_params(key, num_inputs, num_channels, kernel_size=2):
    """Deterministic synthetic init mirroring TemporalConvNet.__init__ shapes.

    Returns raw PyTorch-layout params: w (C_out, C_in, K), b (C_out,), plus
    optional downsample wd (C_out, C_in), bd (C_out,).
    """
    raw = []
    in_ch = num_inputs
    for i, out_ch in enumerate(num_channels):
        keys = jax.random.split(jax.random.fold_in(key, i), 8)
        v1 = 0.01 * jax.random.normal(keys[0], (out_ch, in_ch, kernel_size), jnp.float32)
        g1 = 1.0 + 0.1 * jax.random.normal(keys[1], (out_ch,), jnp.float32)
        b1 = 0.01 * jax.random.normal(keys[2], (out_ch,), jnp.float32)
        v2 = 0.01 * jax.random.normal(keys[3], (out_ch, out_ch, kernel_size), jnp.float32)
        g2 = 1.0 + 0.1 * jax.random.normal(keys[4], (out_ch,), jnp.float32)
        b2 = 0.01 * jax.random.normal(keys[5], (out_ch,), jnp.float32)
        p = {"w1": _weight_norm(v1, g1), "b1": b1,
             "w2": _weight_norm(v2, g2), "b2": b2,
             "dilation": 2 ** i}
        if in_ch != out_ch:
            p["wd"] = 0.01 * jax.random.normal(keys[6], (out_ch, in_ch), jnp.float32)
            p["bd"] = 0.01 * jax.random.normal(keys[7], (out_ch,), jnp.float32)
        raw.append(p)
        in_ch = out_ch
    return raw


def prepare_tcn_params(raw_params, num_inputs):
    """Pack raw params into kernel layout: conv taps stacked on the leading
    axis (K, C_out, C_in), matmul weights bf16, biases (C_out, 1) f32."""
    packed = []
    in_ch = num_inputs
    for p in raw_params:
        out_ch, _, ksize = p["w1"].shape
        has_ds = "wd" in p
        entry = {
            "w1": jnp.transpose(p["w1"], (2, 0, 1)).astype(jnp.bfloat16),
            "b1": p["b1"][:, None].astype(jnp.float32),
            "w2": jnp.transpose(p["w2"], (2, 0, 1)).astype(jnp.bfloat16),
            "b2": p["b2"][:, None].astype(jnp.float32),
            "c_out": out_ch,
            "meta": dict(dilation=p["dilation"], kernel_size=ksize,
                         has_downsample=has_ds),
        }
        if has_ds:
            entry["wd"] = p["wd"].astype(jnp.bfloat16)
            entry["bd"] = p["bd"][:, None].astype(jnp.float32)
        packed.append(entry)
        in_ch = out_ch
    return packed


# ----------------------------- pure-JAX reference --------------------------- #

def _tcn_reference(x, raw_params):
    """f32 reference matching Conv1d(pad=(K-1)d, dilation=d)+Chomp1d semantics."""
    def shift(a, dd):
        if dd == 0:
            return a
        if dd >= a.shape[-1]:
            return jnp.zeros_like(a)
        pad = jnp.zeros(a.shape[:-1] + (dd,), a.dtype)
        return jnp.concatenate([pad, a[..., :-dd]], axis=-1)

    def lrelu(v):
        return jnp.where(v >= 0, v, LEAKY_SLOPE * v)

    h = x
    for p in raw_params:
        d = p["dilation"]
        ksize = p["w1"].shape[2]
        y1 = p["b1"][None, :, None]
        for k in range(ksize):
            y1 = y1 + jnp.einsum("oi,bil->bol", p["w1"][:, :, k],
                                 shift(h, (ksize - 1 - k) * d))
        h1 = lrelu(y1)
        y2 = p["b2"][None, :, None]
        for k in range(ksize):
            y2 = y2 + jnp.einsum("oi,bil->bol", p["w2"][:, :, k],
                                 shift(h1, (ksize - 1 - k) * d))
        h2 = lrelu(y2)
        if "wd" in p:
            res = jnp.einsum("oi,bil->bol", p["wd"], h) + p["bd"][None, :, None]
        else:
            res = h
        h = lrelu(h2 + res)
    return h


if __name__ == "__main__":
    key = jax.random.PRNGKey(0)
    B, C_in, L = 2, 4, 128
    num_channels = [8, 16, 16]   # dilations 1, 2, 4; last block has no downsample

    x = jax.random.normal(jax.random.fold_in(key, 123), (B, C_in, L), jnp.float32)
    raw = init_tcn_params(jax.random.fold_in(key, 7), C_in, num_channels,
                          kernel_size=2)
    packed = prepare_tcn_params(raw, C_in)

    y = temporal_conv_net(x, packed)
    jax.block_until_ready(y)
    assert y.shape == (B, num_channels[-1], L)

    # bf16 matmuls vs f32 reference: loose tolerance
    y_ref = _tcn_reference(x, raw)
    assert jnp.allclose(y, y_ref, rtol=5e-2, atol=1e-2), \
        float(jnp.max(jnp.abs(y - y_ref)))

    # TODO(synk): dropout is treated as identity (inference); training-mode
    # dropout would need pltpu.prng_seed / stateful_bernoulli in-kernel.
    print("KERNEL_OK")
</pallas_src>

<mosaic_0001>
module attributes {stable_mosaic.version = 11 : i64} {
  func.func @_tcn_fused_kernel(%arg0: i32, %arg1: memref<1x4x128xf32, #tpu.memory_space<vmem>>, %arg2: memref<2x8x4xbf16, #tpu.memory_space<vmem>>, %arg3: memref<8x1xf32, #tpu.memory_space<vmem>>, %arg4: memref<2x8x8xbf16, #tpu.memory_space<vmem>>, %arg5: memref<8x1xf32, #tpu.memory_space<vmem>>, %arg6: memref<8x4xbf16, #tpu.memory_space<vmem>>, %arg7: memref<8x1xf32, #tpu.memory_space<vmem>>, %arg8: memref<2x16x8xbf16, #tpu.memory_space<vmem>>, %arg9: memref<16x1xf32, #tpu.memory_space<vmem>>, %arg10: memref<2x16x16xbf16, #tpu.memory_space<vmem>>, %arg11: memref<16x1xf32, #tpu.memory_space<vmem>>, %arg12: memref<16x8xbf16, #tpu.memory_space<vmem>>, %arg13: memref<16x1xf32, #tpu.memory_space<vmem>>, %arg14: memref<2x16x16xbf16, #tpu.memory_space<vmem>>, %arg15: memref<16x1xf32, #tpu.memory_space<vmem>>, %arg16: memref<2x16x16xbf16, #tpu.memory_space<vmem>>, %arg17: memref<16x1xf32, #tpu.memory_space<vmem>>, %arg18: memref<1x16x128xf32, #tpu.memory_space<vmem>>) attributes {dimension_semantics = [#tpu.dimension_semantics<parallel>], iteration_bounds = array<i64: 2>, scalar_prefetch = 0 : i64, scratch_operands = 0 : i64, tpu.core_type = #tpu.core_type<tc>, window_params = [{transform_indices = @transform_0, window_bounds = array<i64: 1, 4, 128>}, {pipeline_mode = #tpu.pipeline_mode<synchronous>, transform_indices = @transform_1, window_bounds = array<i64: 2, 8, 4>}, {pipeline_mode = #tpu.pipeline_mode<synchronous>, transform_indices = @transform_2, window_bounds = array<i64: 8, 1>}, {pipeline_mode = #tpu.pipeline_mode<synchronous>, transform_indices = @transform_3, window_bounds = array<i64: 2, 8, 8>}, {pipeline_mode = #tpu.pipeline_mode<synchronous>, transform_indices = @transform_4, window_bounds = array<i64: 8, 1>}, {pipeline_mode = #tpu.pipeline_mode<synchronous>, transform_indices = @transform_5, window_bounds = array<i64: 8, 4>}, {pipeline_mode = #tpu.pipeline_mode<synchronous>, transform_indices = @transform_6, window_bounds = array<i64: 8, 1>}, {pipeline_mode = #tpu.pipeline_mode<synchronous>, transform_indices = @transform_7, window_bounds = array<i64: 2, 16, 8>}, {pipeline_mode = #tpu.pipeline_mode<synchronous>, transform_indices = @transform_8, window_bounds = array<i64: 16, 1>}, {pipeline_mode = #tpu.pipeline_mode<synchronous>, transform_indices = @transform_9, window_bounds = array<i64: 2, 16, 16>}, {pipeline_mode = #tpu.pipeline_mode<synchronous>, transform_indices = @transform_10, window_bounds = array<i64: 16, 1>}, {pipeline_mode = #tpu.pipeline_mode<synchronous>, transform_indices = @transform_11, window_bounds = array<i64: 16, 8>}, {pipeline_mode = #tpu.pipeline_mode<synchronous>, transform_indices = @transform_12, window_bounds = array<i64: 16, 1>}, {pipeline_mode = #tpu.pipeline_mode<synchronous>, transform_indices = @transform_13, window_bounds = array<i64: 2, 16, 16>}, {pipeline_mode = #tpu.pipeline_mode<synchronous>, transform_indices = @transform_14, window_bounds = array<i64: 16, 1>}, {pipeline_mode = #tpu.pipeline_mode<synchronous>, transform_indices = @transform_15, window_bounds = array<i64: 2, 16, 16>}, {pipeline_mode = #tpu.pipeline_mode<synchronous>, transform_indices = @transform_16, window_bounds = array<i64: 16, 1>}, {transform_indices = @transform_17, window_bounds = array<i64: 1, 16, 128>}]} {
    %0 = tpu.iota {dimensions = array<i32: 2>} : vector<1x1x128xi32>
    %c0 = arith.constant 0 : index
    %c0_0 = arith.constant 0 : index
    %c0_1 = arith.constant 0 : index
    %1 = vector.load %arg1[%c0, %c0_0, %c0_1] : memref<1x4x128xf32, #tpu.memory_space<vmem>>, vector<1x4x128xf32>
    %c1_i32 = arith.constant 1 : i32
    %2 = vector.broadcast %c1_i32 : i32 to vector<1x1x128xi32>
    %3 = arith.cmpi sge, %0, %2 : vector<1x1x128xi32>
    %c1_i32_2 = arith.constant 1 : i32
    %4 = tpu.dynamic_rotate %1 by %c1_i32_2 dim 2 : vector<1x4x128xf32>, i32 -> vector<1x4x128xf32>
    %cst = arith.constant 0.000000e+00 : f32
    %5 = vector.shape_cast %3 : vector<1x1x128xi1> to vector<1x1x128xi1>
    %6 = vector.broadcast %5 : vector<1x1x128xi1> to vector<1x4x128xi1>
    %7 = vector.broadcast %cst : f32 to vector<1x4x128xf32>
    %8 = arith.select %6, %4, %7 : vector<1x4x128xi1>, vector<1x4x128xf32>
    %9 = arith.truncf %8 : vector<1x4x128xf32> to vector<1x4x128xbf16>
    %c0_3 = arith.constant 0 : index
    %c0_4 = arith.constant 0 : index
    %c0_5 = arith.constant 0 : index
    %10 = vector.load %arg2[%c0_3, %c0_4, %c0_5] : memref<2x8x4xbf16, #tpu.memory_space<vmem>>, vector<1x8x4xbf16>
    %11 = vector.shape_cast %10 : vector<1x8x4xbf16> to vector<8x4xbf16>
    %12 = vector.shape_cast %11 : vector<8x4xbf16> to vector<1x8x4xbf16>
    "tpu.trace_start"() <{level = 10 : i32, message = "boc,bcl->bol"}> : () -> ()
    %cst_6 = arith.constant dense<0.000000e+00> : vector<1x8x128xf32>
    %13 = tpu.matmul %12, %9, %cst_6 {dimension_numbers = #tpu.dot_dimension_numbers<[2], [1], [1], [2], [0, 0, 0, 1, 1, 2], [0], [0]>} : vector<1x8x4xbf16>, vector<1x4x128xbf16>, vector<1x8x128xf32> -> vector<1x8x128xf32>
    "tpu.trace_stop"() : () -> ()
    %14 = arith.truncf %1 : vector<1x4x128xf32> to vector<1x4x128xbf16>
    %c1 = arith.constant 1 : index
    %c0_7 = arith.constant 0 : index
    %c0_8 = arith.constant 0 : index
    %15 = vector.load %arg2[%c1, %c0_7, %c0_8] : memref<2x8x4xbf16, #tpu.memory_space<vmem>>, vector<1x8x4xbf16>
    %16 = vector.shape_cast %15 : vector<1x8x4xbf16> to vector<8x4xbf16>
    %17 = vector.shape_cast %16 : vector<8x4xbf16> to vector<1x8x4xbf16>
    "tpu.trace_start"() <{level = 10 : i32, message = "boc,bcl->bol"}> : () -> ()
    %cst_9 = arith.constant dense<0.000000e+00> : vector<1x8x128xf32>
    %18 = tpu.matmul %17, %14, %cst_9 {dimension_numbers = #tpu.dot_dimension_numbers<[2], [1], [1], [2], [0, 0, 0, 1, 1, 2], [0], [0]>} : vector<1x8x4xbf16>, vector<1x4x128xbf16>, vector<1x8x128xf32> -> vector<1x8x128xf32>
    "tpu.trace_stop"() : () -> ()
    %19 = arith.addf %13, %18 : vector<1x8x128xf32>
    %c0_10 = arith.constant 0 : index
    %c0_11 = arith.constant 0 : index
    %20 = vector.load %arg3[%c0_10, %c0_11] : memref<8x1xf32, #tpu.memory_space<vmem>>, vector<8x1xf32>
    %21 = vector.shape_cast %20 : vector<8x1xf32> to vector<1x8x1xf32>
    %22 = vector.broadcast %21 : vector<1x8x1xf32> to vector<1x8x128xf32>
    %23 = arith.addf %19, %22 : vector<1x8x128xf32>
    %cst_12 = arith.constant 0.00999999977 : f32
    %24 = vector.broadcast %cst_12 : f32 to vector<1x8x128xf32>
    %25 = arith.mulf %24, %23 : vector<1x8x128xf32>
    %26 = arith.maximumf %23, %25 : vector<1x8x128xf32>
    %c1_i32_13 = arith.constant 1 : i32
    %27 = tpu.dynamic_rotate %26 by %c1_i32_13 dim 2 : vector<1x8x128xf32>, i32 -> vector<1x8x128xf32>
    %cst_14 = arith.constant 0.000000e+00 : f32
    %28 = vector.shape_cast %3 : vector<1x1x128xi1> to vector<1x1x128xi1>
    %29 = vector.broadcast %28 : vector<1x1x128xi1> to vector<1x8x128xi1>
    %30 = vector.broadcast %cst_14 : f32 to vector<1x8x128xf32>
    %31 = arith.select %29, %27, %30 : vector<1x8x128xi1>, vector<1x8x128xf32>
    %32 = arith.truncf %31 : vector<1x8x128xf32> to vector<1x8x128xbf16>
    %c0_15 = arith.constant 0 : index
    %c0_16 = arith.constant 0 : index
    %c0_17 = arith.constant 0 : index
    %33 = vector.load %arg4[%c0_15, %c0_16, %c0_17] : memref<2x8x8xbf16, #tpu.memory_space<vmem>>, vector<1x8x8xbf16>
    %34 = vector.shape_cast %33 : vector<1x8x8xbf16> to vector<8x8xbf16>
    %35 = vector.shape_cast %34 : vector<8x8xbf16> to vector<1x8x8xbf16>
    "tpu.trace_start"() <{level = 10 : i32, message = "boc,bcl->bol"}> : () -> ()
    %cst_18 = arith.constant dense<0.000000e+00> : vector<1x8x128xf32>
    %36 = tpu.matmul %35, %32, %cst_18 {dimension_numbers = #tpu.dot_dimension_numbers<[2], [1], [1], [2], [0, 0, 0, 1, 1, 2], [0], [0]>} : vector<1x8x8xbf16>, vector<1x8x128xbf16>, vector<1x8x128xf32> -> vector<1x8x128xf32>
    "tpu.trace_stop"() : () -> ()
    %37 = arith.truncf %26 : vector<1x8x128xf32> to vector<1x8x128xbf16>
    %c1_19 = arith.constant 1 : index
    %c0_20 = arith.constant 0 : index
    %c0_21 = arith.constant 0 : index
    %38 = vector.load %arg4[%c1_19, %c0_20, %c0_21] : memref<2x8x8xbf16, #tpu.memory_space<vmem>>, vector<1x8x8xbf16>
    %39 = vector.shape_cast %38 : vector<1x8x8xbf16> to vector<8x8xbf16>
    %40 = vector.shape_cast %39 : vector<8x8xbf16> to vector<1x8x8xbf16>
    "tpu.trace_start"() <{level = 10 : i32, message = "boc,bcl->bol"}> : () -> ()
    %cst_22 = arith.constant dense<0.000000e+00> : vector<1x8x128xf32>
    %41 = tpu.matmul %40, %37, %cst_22 {dimension_numbers = #tpu.dot_dimension_numbers<[2], [1], [1], [2], [0, 0, 0, 1, 1, 2], [0], [0]>} : vector<1x8x8xbf16>, vector<1x8x128xbf16>, vector<1x8x128xf32> -> vector<1x8x128xf32>
    "tpu.trace_stop"() : () -> ()
    %42 = arith.addf %36, %41 : vector<1x8x128xf32>
    %c0_23 = arith.constant 0 : index
    %c0_24 = arith.constant 0 : index
    %43 = vector.load %arg5[%c0_23, %c0_24] : memref<8x1xf32, #tpu.memory_space<vmem>>, vector<8x1xf32>
    %44 = vector.shape_cast %43 : vector<8x1xf32> to vector<1x8x1xf32>
    %45 = vector.broadcast %44 : vector<1x8x1xf32> to vector<1x8x128xf32>
    %46 = arith.addf %42, %45 : vector<1x8x128xf32>
    %cst_25 = arith.constant 0.00999999977 : f32
    %47 = vector.broadcast %cst_25 : f32 to vector<1x8x128xf32>
    %48 = arith.mulf %47, %46 : vector<1x8x128xf32>
    %49 = arith.maximumf %46, %48 : vector<1x8x128xf32>
    %c0_26 = arith.constant 0 : index
    %c0_27 = arith.constant 0 : index
    %50 = vector.load %arg6[%c0_26, %c0_27] : memref<8x4xbf16, #tpu.memory_space<vmem>>, vector<8x4xbf16>
    %51 = vector.shape_cast %50 : vector<8x4xbf16> to vector<1x8x4xbf16>
    %52 = arith.truncf %1 : vector<1x4x128xf32> to vector<1x4x128xbf16>
    "tpu.trace_start"() <{level = 10 : i32, message = "boc,bcl->bol"}> : () -> ()
    %cst_28 = arith.constant dense<0.000000e+00> : vector<1x8x128xf32>
    %53 = tpu.matmul %51, %52, %cst_28 {dimension_numbers = #tpu.dot_dimension_numbers<[2], [1], [1], [2], [0, 0, 0, 1, 1, 2], [0], [0]>} : vector<1x8x4xbf16>, vector<1x4x128xbf16>, vector<1x8x128xf32> -> vector<1x8x128xf32>
    "tpu.trace_stop"() : () -> ()
    %c0_29 = arith.constant 0 : index
    %c0_30 = arith.constant 0 : index
    %54 = vector.load %arg7[%c0_29, %c0_30] : memref<8x1xf32, #tpu.memory_space<vmem>>, vector<8x1xf32>
    %55 = vector.shape_cast %54 : vector<8x1xf32> to vector<1x8x1xf32>
    %56 = vector.broadcast %55 : vector<1x8x1xf32> to vector<1x8x128xf32>
    %57 = arith.addf %53, %56 : vector<1x8x128xf32>
    %58 = arith.addf %49, %57 : vector<1x8x128xf32>
    %cst_31 = arith.constant 0.00999999977 : f32
    %59 = vector.broadcast %cst_31 : f32 to vector<1x8x128xf32>
    %60 = arith.mulf %59, %58 : vector<1x8x128xf32>
    %61 = arith.maximumf %58, %60 : vector<1x8x128xf32>
    %c2_i32 = arith.constant 2 : i32
    %62 = vector.broadcast %c2_i32 : i32 to vector<1x1x128xi32>
    %63 = arith.cmpi sge, %0, %62 : vector<1x1x128xi32>
    %c2_i32_32 = arith.constant 2 : i32
    %64 = tpu.dynamic_rotate %61 by %c2_i32_32 dim 2 : vector<1x8x128xf32>, i32 -> vector<1x8x128xf32>
    %cst_33 = arith.constant 0.000000e+00 : f32
    %65 = vector.shape_cast %63 : vector<1x1x128xi1> to vector<1x1x128xi1>
    %66 = vector.broadcast %65 : vector<1x1x128xi1> to vector<1x8x128xi1>
    %67 = vector.broadcast %cst_33 : f32 to vector<1x8x128xf32>
    %68 = arith.select %66, %64, %67 : vector<1x8x128xi1>, vector<1x8x128xf32>
    %69 = arith.truncf %68 : vector<1x8x128xf32> to vector<1x8x128xbf16>
    %c0_34 = arith.constant 0 : index
    %c0_35 = arith.constant 0 : index
    %c0_36 = arith.constant 0 : index
    %70 = vector.load %arg8[%c0_34, %c0_35, %c0_36] : memref<2x16x8xbf16, #tpu.memory_space<vmem>>, vector<1x16x8xbf16>
    %71 = vector.shape_cast %70 : vector<1x16x8xbf16> to vector<16x8xbf16>
    %72 = vector.shape_cast %71 : vector<16x8xbf16> to vector<1x16x8xbf16>
    "tpu.trace_start"() <{level = 10 : i32, message = "boc,bcl->bol"}> : () -> ()
    %cst_37 = arith.constant dense<0.000000e+00> : vector<1x16x128xf32>
    %73 = tpu.matmul %72, %69, %cst_37 {dimension_numbers = #tpu.dot_dimension_numbers<[2], [1], [1], [2], [0, 0, 0, 1, 1, 2], [0], [0]>} : vector<1x16x8xbf16>, vector<1x8x128xbf16>, vector<1x16x128xf32> -> vector<1x16x128xf32>
    "tpu.trace_stop"() : () -> ()
    %74 = arith.truncf %61 : vector<1x8x128xf32> to vector<1x8x128xbf16>
    %c1_38 = arith.constant 1 : index
    %c0_39 = arith.constant 0 : index
    %c0_40 = arith.constant 0 : index
    %75 = vector.load %arg8[%c1_38, %c0_39, %c0_40] : memref<2x16x8xbf16, #tpu.memory_space<vmem>>, vector<1x16x8xbf16>
    %76 = vector.shape_cast %75 : vector<1x16x8xbf16> to vector<16x8xbf16>
    %77 = vector.shape_cast %76 : vector<16x8xbf16> to vector<1x16x8xbf16>
    "tpu.trace_start"() <{level = 10 : i32, message = "boc,bcl->bol"}> : () -> ()
    %cst_41 = arith.constant dense<0.000000e+00> : vector<1x16x128xf32>
    %78 = tpu.matmul %77, %74, %cst_41 {dimension_numbers = #tpu.dot_dimension_numbers<[2], [1], [1], [2], [0, 0, 0, 1, 1, 2], [0], [0]>} : vector<1x16x8xbf16>, vector<1x8x128xbf16>, vector<1x16x128xf32> -> vector<1x16x128xf32>
    "tpu.trace_stop"() : () -> ()
    %79 = arith.addf %73, %78 : vector<1x16x128xf32>
    %c0_42 = arith.constant 0 : index
    %c0_43 = arith.constant 0 : index
    %80 = vector.load %arg9[%c0_42, %c0_43] : memref<16x1xf32, #tpu.memory_space<vmem>>, vector<16x1xf32>
    %81 = vector.shape_cast %80 : vector<16x1xf32> to vector<1x16x1xf32>
    %82 = vector.broadcast %81 : vector<1x16x1xf32> to vector<1x16x128xf32>
    %83 = arith.addf %79, %82 : vector<1x16x128xf32>
    %cst_44 = arith.constant 0.00999999977 : f32
    %84 = vector.broadcast %cst_44 : f32 to vector<1x16x128xf32>
    %85 = arith.mulf %84, %83 : vector<1x16x128xf32>
    %86 = arith.maximumf %83, %85 : vector<1x16x128xf32>
    %c2_i32_45 = arith.constant 2 : i32
    %87 = tpu.dynamic_rotate %86 by %c2_i32_45 dim 2 : vector<1x16x128xf32>, i32 -> vector<1x16x128xf32>
    %cst_46 = arith.constant 0.000000e+00 : f32
    %88 = vector.shape_cast %63 : vector<1x1x128xi1> to vector<1x1x128xi1>
    %89 = vector.broadcast %88 : vector<1x1x128xi1> to vector<1x16x128xi1>
    %90 = vector.broadcast %cst_46 : f32 to vector<1x16x128xf32>
    %91 = arith.select %89, %87, %90 : vector<1x16x128xi1>, vector<1x16x128xf32>
    %92 = arith.truncf %91 : vector<1x16x128xf32> to vector<1x16x128xbf16>
    %c0_47 = arith.constant 0 : index
    %c0_48 = arith.constant 0 : index
    %c0_49 = arith.constant 0 : index
    %93 = vector.load %arg10[%c0_47, %c0_48, %c0_49] : memref<2x16x16xbf16, #tpu.memory_space<vmem>>, vector<1x16x16xbf16>
    %94 = vector.shape_cast %93 : vector<1x16x16xbf16> to vector<16x16xbf16>
    %95 = vector.shape_cast %94 : vector<16x16xbf16> to vector<1x16x16xbf16>
    "tpu.trace_start"() <{level = 10 : i32, message = "boc,bcl->bol"}> : () -> ()
    %cst_50 = arith.constant dense<0.000000e+00> : vector<1x16x128xf32>
    %96 = tpu.matmul %95, %92, %cst_50 {dimension_numbers = #tpu.dot_dimension_numbers<[2], [1], [1], [2], [0, 0, 0, 1, 1, 2], [0], [0]>} : vector<1x16x16xbf16>, vector<1x16x128xbf16>, vector<1x16x128xf32> -> vector<1x16x128xf32>
    "tpu.trace_stop"() : () -> ()
    %97 = arith.truncf %86 : vector<1x16x128xf32> to vector<1x16x128xbf16>
    %c1_51 = arith.constant 1 : index
    %c0_52 = arith.constant 0 : index
    %c0_53 = arith.constant 0 : index
    %98 = vector.load %arg10[%c1_51, %c0_52, %c0_53] : memref<2x16x16xbf16, #tpu.memory_space<vmem>>, vector<1x16x16xbf16>
    %99 = vector.shape_cast %98 : vector<1x16x16xbf16> to vector<16x16xbf16>
    %100 = vector.shape_cast %99 : vector<16x16xbf16> to vector<1x16x16xbf16>
    "tpu.trace_start"() <{level = 10 : i32, message = "boc,bcl->bol"}> : () -> ()
    %cst_54 = arith.constant dense<0.000000e+00> : vector<1x16x128xf32>
    %101 = tpu.matmul %100, %97, %cst_54 {dimension_numbers = #tpu.dot_dimension_numbers<[2], [1], [1], [2], [0, 0, 0, 1, 1, 2], [0], [0]>} : vector<1x16x16xbf16>, vector<1x16x128xbf16>, vector<1x16x128xf32> -> vector<1x16x128xf32>
    "tpu.trace_stop"() : () -> ()
    %102 = arith.addf %96, %101 : vector<1x16x128xf32>
    %c0_55 = arith.constant 0 : index
    %c0_56 = arith.constant 0 : index
    %103 = vector.load %arg11[%c0_55, %c0_56] : memref<16x1xf32, #tpu.memory_space<vmem>>, vector<16x1xf32>
    %104 = vector.shape_cast %103 : vector<16x1xf32> to vector<1x16x1xf32>
    %105 = vector.broadcast %104 : vector<1x16x1xf32> to vector<1x16x128xf32>
    %106 = arith.addf %102, %105 : vector<1x16x128xf32>
    %cst_57 = arith.constant 0.00999999977 : f32
    %107 = vector.broadcast %cst_57 : f32 to vector<1x16x128xf32>
    %108 = arith.mulf %107, %106 : vector<1x16x128xf32>
    %109 = arith.maximumf %106, %108 : vector<1x16x128xf32>
    %c0_58 = arith.constant 0 : index
    %c0_59 = arith.constant 0 : index
    %110 = vector.load %arg12[%c0_58, %c0_59] : memref<16x8xbf16, #tpu.memory_space<vmem>>, vector<16x8xbf16>
    %111 = vector.shape_cast %110 : vector<16x8xbf16> to vector<1x16x8xbf16>
    %112 = arith.truncf %61 : vector<1x8x128xf32> to vector<1x8x128xbf16>
    "tpu.trace_start"() <{level = 10 : i32, message = "boc,bcl->bol"}> : () -> ()
    %cst_60 = arith.constant dense<0.000000e+00> : vector<1x16x128xf32>
    %113 = tpu.matmul %111, %112, %cst_60 {dimension_numbers = #tpu.dot_dimension_numbers<[2], [1], [1], [2], [0, 0, 0, 1, 1, 2], [0], [0]>} : vector<1x16x8xbf16>, vector<1x8x128xbf16>, vector<1x16x128xf32> -> vector<1x16x128xf32>
    "tpu.trace_stop"() : () -> ()
    %c0_61 = arith.constant 0 : index
    %c0_62 = arith.constant 0 : index
    %114 = vector.load %arg13[%c0_61, %c0_62] : memref<16x1xf32, #tpu.memory_space<vmem>>, vector<16x1xf32>
    %115 = vector.shape_cast %114 : vector<16x1xf32> to vector<1x16x1xf32>
    %116 = vector.broadcast %115 : vector<1x16x1xf32> to vector<1x16x128xf32>
    %117 = arith.addf %113, %116 : vector<1x16x128xf32>
    %118 = arith.addf %109, %117 : vector<1x16x128xf32>
    %cst_63 = arith.constant 0.00999999977 : f32
    %119 = vector.broadcast %cst_63 : f32 to vector<1x16x128xf32>
    %120 = arith.mulf %119, %118 : vector<1x16x128xf32>
    %121 = arith.maximumf %118, %120 : vector<1x16x128xf32>
    %c4_i32 = arith.constant 4 : i32
    %122 = vector.broadcast %c4_i32 : i32 to vector<1x1x128xi32>
    %123 = arith.cmpi sge, %0, %122 : vector<1x1x128xi32>
    %c4_i32_64 = arith.constant 4 : i32
    %124 = tpu.dynamic_rotate %121 by %c4_i32_64 dim 2 : vector<1x16x128xf32>, i32 -> vector<1x16x128xf32>
    %cst_65 = arith.constant 0.000000e+00 : f32
    %125 = vector.shape_cast %123 : vector<1x1x128xi1> to vector<1x1x128xi1>
    %126 = vector.broadcast %125 : vector<1x1x128xi1> to vector<1x16x128xi1>
    %127 = vector.broadcast %cst_65 : f32 to vector<1x16x128xf32>
    %128 = arith.select %126, %124, %127 : vector<1x16x128xi1>, vector<1x16x128xf32>
    %129 = arith.truncf %128 : vector<1x16x128xf32> to vector<1x16x128xbf16>
    %c0_66 = arith.constant 0 : index
    %c0_67 = arith.constant 0 : index
    %c0_68 = arith.constant 0 : index
    %130 = vector.load %arg14[%c0_66, %c0_67, %c0_68] : memref<2x16x16xbf16, #tpu.memory_space<vmem>>, vector<1x16x16xbf16>
    %131 = vector.shape_cast %130 : vector<1x16x16xbf16> to vector<16x16xbf16>
    %132 = vector.shape_cast %131 : vector<16x16xbf16> to vector<1x16x16xbf16>
    "tpu.trace_start"() <{level = 10 : i32, message = "boc,bcl->bol"}> : () -> ()
    %cst_69 = arith.constant dense<0.000000e+00> : vector<1x16x128xf32>
    %133 = tpu.matmul %132, %129, %cst_69 {dimension_numbers = #tpu.dot_dimension_numbers<[2], [1], [1], [2], [0, 0, 0, 1, 1, 2], [0], [0]>} : vector<1x16x16xbf16>, vector<1x16x128xbf16>, vector<1x16x128xf32> -> vector<1x16x128xf32>
    "tpu.trace_stop"() : () -> ()
    %134 = arith.truncf %121 : vector<1x16x128xf32> to vector<1x16x128xbf16>
    %c1_70 = arith.constant 1 : index
    %c0_71 = arith.constant 0 : index
    %c0_72 = arith.constant 0 : index
    %135 = vector.load %arg14[%c1_70, %c0_71, %c0_72] : memref<2x16x16xbf16, #tpu.memory_space<vmem>>, vector<1x16x16xbf16>
    %136 = vector.shape_cast %135 : vector<1x16x16xbf16> to vector<16x16xbf16>
    %137 = vector.shape_cast %136 : vector<16x16xbf16> to vector<1x16x16xbf16>
    "tpu.trace_start"() <{level = 10 : i32, message = "boc,bcl->bol"}> : () -> ()
    %cst_73 = arith.constant dense<0.000000e+00> : vector<1x16x128xf32>
    %138 = tpu.matmul %137, %134, %cst_73 {dimension_numbers = #tpu.dot_dimension_numbers<[2], [1], [1], [2], [0, 0, 0, 1, 1, 2], [0], [0]>} : vector<1x16x16xbf16>, vector<1x16x128xbf16>, vector<1x16x128xf32> -> vector<1x16x128xf32>
    "tpu.trace_stop"() : () -> ()
    %139 = arith.addf %133, %138 : vector<1x16x128xf32>
    %c0_74 = arith.constant 0 : index
    %c0_75 = arith.constant 0 : index
    %140 = vector.load %arg15[%c0_74, %c0_75] : memref<16x1xf32, #tpu.memory_space<vmem>>, vector<16x1xf32>
    %141 = vector.shape_cast %140 : vector<16x1xf32> to vector<1x16x1xf32>
    %142 = vector.broadcast %141 : vector<1x16x1xf32> to vector<1x16x128xf32>
    %143 = arith.addf %139, %142 : vector<1x16x128xf32>
    %cst_76 = arith.constant 0.00999999977 : f32
    %144 = vector.broadcast %cst_76 : f32 to vector<1x16x128xf32>
    %145 = arith.mulf %144, %143 : vector<1x16x128xf32>
    %146 = arith.maximumf %143, %145 : vector<1x16x128xf32>
    %c4_i32_77 = arith.constant 4 : i32
    %147 = tpu.dynamic_rotate %146 by %c4_i32_77 dim 2 : vector<1x16x128xf32>, i32 -> vector<1x16x128xf32>
    %cst_78 = arith.constant 0.000000e+00 : f32
    %148 = vector.shape_cast %123 : vector<1x1x128xi1> to vector<1x1x128xi1>
    %149 = vector.broadcast %148 : vector<1x1x128xi1> to vector<1x16x128xi1>
    %150 = vector.broadcast %cst_78 : f32 to vector<1x16x128xf32>
    %151 = arith.select %149, %147, %150 : vector<1x16x128xi1>, vector<1x16x128xf32>
    %152 = arith.truncf %151 : vector<1x16x128xf32> to vector<1x16x128xbf16>
    %c0_79 = arith.constant 0 : index
    %c0_80 = arith.constant 0 : index
    %c0_81 = arith.constant 0 : index
    %153 = vector.load %arg16[%c0_79, %c0_80, %c0_81] : memref<2x16x16xbf16, #tpu.memory_space<vmem>>, vector<1x16x16xbf16>
    %154 = vector.shape_cast %153 : vector<1x16x16xbf16> to vector<16x16xbf16>
    %155 = vector.shape_cast %154 : vector<16x16xbf16> to vector<1x16x16xbf16>
    "tpu.trace_start"() <{level = 10 : i32, message = "boc,bcl->bol"}> : () -> ()
    %cst_82 = arith.constant dense<0.000000e+00> : vector<1x16x128xf32>
    %156 = tpu.matmul %155, %152, %cst_82 {dimension_numbers = #tpu.dot_dimension_numbers<[2], [1], [1], [2], [0, 0, 0, 1, 1, 2], [0], [0]>} : vector<1x16x16xbf16>, vector<1x16x128xbf16>, vector<1x16x128xf32> -> vector<1x16x128xf32>
    "tpu.trace_stop"() : () -> ()
    %157 = arith.truncf %146 : vector<1x16x128xf32> to vector<1x16x128xbf16>
    %c1_83 = arith.constant 1 : index
    %c0_84 = arith.constant 0 : index
    %c0_85 = arith.constant 0 : index
    %158 = vector.load %arg16[%c1_83, %c0_84, %c0_85] : memref<2x16x16xbf16, #tpu.memory_space<vmem>>, vector<1x16x16xbf16>
    %159 = vector.shape_cast %158 : vector<1x16x16xbf16> to vector<16x16xbf16>
    %160 = vector.shape_cast %159 : vector<16x16xbf16> to vector<1x16x16xbf16>
    "tpu.trace_start"() <{level = 10 : i32, message = "boc,bcl->bol"}> : () -> ()
    %cst_86 = arith.constant dense<0.000000e+00> : vector<1x16x128xf32>
    %161 = tpu.matmul %160, %157, %cst_86 {dimension_numbers = #tpu.dot_dimension_numbers<[2], [1], [1], [2], [0, 0, 0, 1, 1, 2], [0], [0]>} : vector<1x16x16xbf16>, vector<1x16x128xbf16>, vector<1x16x128xf32> -> vector<1x16x128xf32>
    "tpu.trace_stop"() : () -> ()
    %162 = arith.addf %156, %161 : vector<1x16x128xf32>
    %c0_87 = arith.constant 0 : index
    %c0_88 = arith.constant 0 : index
    %163 = vector.load %arg17[%c0_87, %c0_88] : memref<16x1xf32, #tpu.memory_space<vmem>>, vector<16x1xf32>
    %164 = vector.shape_cast %163 : vector<16x1xf32> to vector<1x16x1xf32>
    %165 = vector.broadcast %164 : vector<1x16x1xf32> to vector<1x16x128xf32>
    %166 = arith.addf %162, %165 : vector<1x16x128xf32>
    %cst_89 = arith.constant 0.00999999977 : f32
    %167 = vector.broadcast %cst_89 : f32 to vector<1x16x128xf32>
    %168 = arith.mulf %167, %166 : vector<1x16x128xf32>
    %169 = arith.maximumf %166, %168 : vector<1x16x128xf32>
    %170 = arith.addf %169, %121 : vector<1x16x128xf32>
    %cst_90 = arith.constant 0.00999999977 : f32
    %171 = vector.broadcast %cst_90 : f32 to vector<1x16x128xf32>
    %172 = arith.mulf %171, %170 : vector<1x16x128xf32>
    %173 = arith.maximumf %170, %172 : vector<1x16x128xf32>
    %c0_91 = arith.constant 0 : index
    %c0_92 = arith.constant 0 : index
    %c0_93 = arith.constant 0 : index
    %174 = vector.load %arg18[%c0_91, %c0_92, %c0_93] : memref<1x16x128xf32, #tpu.memory_space<vmem>>, vector<1x16x128xf32>
    tpu.vector_store %arg18[%c0_91, %c0_92, %c0_93], %173 {strides = array<i32>} : memref<1x16x128xf32, #tpu.memory_space<vmem>>, vector<1x16x128xf32>,
    return
  }
  func.func @transform_0(%arg0: i32) -> (i32, i32, i32) {
    %c0_i32 = arith.constant 0 : i32
    %c0_i32_0 = arith.constant 0 : i32
    %c0_i32_1 = arith.constant 0 : i32
    return %arg0, %c0_i32, %c0_i32_0 : i32, i32, i32
  }
  func.func @transform_1(%arg0: i32) -> (i32, i32, i32) {
    %c0_i32 = arith.constant 0 : i32
    %c0_i32_0 = arith.constant 0 : i32
    %c0_i32_1 = arith.constant 0 : i32
    %c0_i32_2 = arith.constant 0 : i32
    return %c0_i32, %c0_i32_0, %c0_i32_1 : i32, i32, i32
  }
  func.func @transform_2(%arg0: i32) -> (i32, i32) {
    %c0_i32 = arith.constant 0 : i32
    %c0_i32_0 = arith.constant 0 : i32
    %c0_i32_1 = arith.constant 0 : i32
    return %c0_i32, %c0_i32_0 : i32, i32
  }
  func.func @transform_3(%arg0: i32) -> (i32, i32, i32) {
    %c0_i32 = arith.constant 0 : i32
    %c0_i32_0 = arith.constant 0 : i32
    %c0_i32_1 = arith.constant 0 : i32
    %c0_i32_2 = arith.constant 0 : i32
    return %c0_i32, %c0_i32_0, %c0_i32_1 : i32, i32, i32
  }
  func.func @transform_4(%arg0: i32) -> (i32, i32) {
    %c0_i32 = arith.constant 0 : i32
    %c0_i32_0 = arith.constant 0 : i32
    %c0_i32_1 = arith.constant 0 : i32
    return %c0_i32, %c0_i32_0 : i32, i32
  }
  func.func @transform_5(%arg0: i32) -> (i32, i32) {
    %c0_i32 = arith.constant 0 : i32
    %c0_i32_0 = arith.constant 0 : i32
    %c0_i32_1 = arith.constant 0 : i32
    return %c0_i32, %c0_i32_0 : i32, i32
  }
  func.func @transform_6(%arg0: i32) -> (i32, i32) {
    %c0_i32 = arith.constant 0 : i32
    %c0_i32_0 = arith.constant 0 : i32
    %c0_i32_1 = arith.constant 0 : i32
    return %c0_i32, %c0_i32_0 : i32, i32
  }
  func.func @transform_7(%arg0: i32) -> (i32, i32, i32) {
    %c0_i32 = arith.constant 0 : i32
    %c0_i32_0 = arith.constant 0 : i32
    %c0_i32_1 = arith.constant 0 : i32
    %c0_i32_2 = arith.constant 0 : i32
    return %c0_i32, %c0_i32_0, %c0_i32_1 : i32, i32, i32
  }
  func.func @transform_8(%arg0: i32) -> (i32, i32) {
    %c0_i32 = arith.constant 0 : i32
    %c0_i32_0 = arith.constant 0 : i32
    %c0_i32_1 = arith.constant 0 : i32
    return %c0_i32, %c0_i32_0 : i32, i32
  }
  func.func @transform_9(%arg0: i32) -> (i32, i32, i32) {
    %c0_i32 = arith.constant 0 : i32
    %c0_i32_0 = arith.constant 0 : i32
    %c0_i32_1 = arith.constant 0 : i32
    %c0_i32_2 = arith.constant 0 : i32
    return %c0_i32, %c0_i32_0, %c0_i32_1 : i32, i32, i32
  }
  func.func @transform_10(%arg0: i32) -> (i32, i32) {
    %c0_i32 = arith.constant 0 : i32
    %c0_i32_0 = arith.constant 0 : i32
    %c0_i32_1 = arith.constant 0 : i32
    return %c0_i32, %c0_i32_0 : i32, i32
  }
  func.func @transform_11(%arg0: i32) -> (i32, i32) {
    %c0_i32 = arith.constant 0 : i32
    %c0_i32_0 = arith.constant 0 : i32
    %c0_i32_1 = arith.constant 0 : i32
    return %c0_i32, %c0_i32_0 : i32, i32
  }
  func.func @transform_12(%arg0: i32) -> (i32, i32) {
    %c0_i32 = arith.constant 0 : i32
    %c0_i32_0 = arith.constant 0 : i32
    %c0_i32_1 = arith.constant 0 : i32
    return %c0_i32, %c0_i32_0 : i32, i32
  }
  func.func @transform_13(%arg0: i32) -> (i32, i32, i32) {
    %c0_i32 = arith.constant 0 : i32
    %c0_i32_0 = arith.constant 0 : i32
    %c0_i32_1 = arith.constant 0 : i32
    %c0_i32_2 = arith.constant 0 : i32
    return %c0_i32, %c0_i32_0, %c0_i32_1 : i32, i32, i32
  }
  func.func @transform_14(%arg0: i32) -> (i32, i32) {
    %c0_i32 = arith.constant 0 : i32
    %c0_i32_0 = arith.constant 0 : i32
    %c0_i32_1 = arith.constant 0 : i32
    return %c0_i32, %c0_i32_0 : i32, i32
  }
  func.func @transform_15(%arg0: i32) -> (i32, i32, i32) {
    %c0_i32 = arith.constant 0 : i32
    %c0_i32_0 = arith.constant 0 : i32
    %c0_i32_1 = arith.constant 0 : i32
    %c0_i32_2 = arith.constant 0 : i32
    return %c0_i32, %c0_i32_0, %c0_i32_1 : i32, i32, i32
  }
  func.func @transform_16(%arg0: i32) -> (i32, i32) {
    %c0_i32 = arith.constant 0 : i32
    %c0_i32_0 = arith.constant 0 : i32
    %c0_i32_1 = arith.constant 0 : i32
    return %c0_i32, %c0_i32_0 : i32, i32
  }
  func.func @transform_17(%arg0: i32) -> (i32, i32, i32) {
    %c0_i32 = arith.constant 0 : i32
    %c0_i32_0 = arith.constant 0 : i32
    %c0_i32_1 = arith.constant 0 : i32
    return %arg0, %c0_i32, %c0_i32_0 : i32, i32, i32
  }
}

</mosaic_0001>

<llo_original>
// kernel: tpu_custom_call.1
$region0: #{tpu_custom_call.1}
  #allocation0 [shape = 'u32[]', space=smem, size = 0x4, offset = 0x4, fixed_abs, tag = 'smem constant byte address 0x4 - core index']
  #allocation1 [shape = 'u32[144,128]{1,0:T(1,128)}', space=vmem, size = 0x12000, scoped, tag = 'internal scratch']
  %s0 = inlined_call_operand.vmem [shape: f32[2,4,128], index: 0, kind: input, shape index: {}]
  %s1 = inlined_call_operand.vmem [shape: bf16[2,8,4], index: 1, kind: input, shape index: {}]
  %s2 = inlined_call_operand.vmem [shape: f32[8,1], index: 2, kind: input, shape index: {}]
  %s3 = inlined_call_operand.vmem [shape: bf16[2,8,8], index: 3, kind: input, shape index: {}]
  %s4 = inlined_call_operand.vmem [shape: f32[8,1], index: 4, kind: input, shape index: {}]
  %s5 = inlined_call_operand.vmem [shape: bf16[8,4], index: 5, kind: input, shape index: {}]
  %s6 = inlined_call_operand.vmem [shape: f32[8,1], index: 6, kind: input, shape index: {}]
  %s7 = inlined_call_operand.vmem [shape: bf16[2,16,8], index: 7, kind: input, shape index: {}]
  %s8 = inlined_call_operand.vmem [shape: f32[16,1], index: 8, kind: input, shape index: {}]
  %s9 = inlined_call_operand.vmem [shape: bf16[2,16,16], index: 9, kind: input, shape index: {}]
  %s10 = inlined_call_operand.vmem [shape: f32[16,1], index: 10, kind: input, shape index: {}]
  %s11 = inlined_call_operand.vmem [shape: bf16[16,8], index: 11, kind: input, shape index: {}]
  %s12 = inlined_call_operand.vmem [shape: f32[16,1], index: 12, kind: input, shape index: {}]
  %s13 = inlined_call_operand.vmem [shape: bf16[2,16,16], index: 13, kind: input, shape index: {}]
  %s14 = inlined_call_operand.vmem [shape: f32[16,1], index: 14, kind: input, shape index: {}]
  %s15 = inlined_call_operand.vmem [shape: bf16[2,16,16], index: 15, kind: input, shape index: {}]
  %s16 = inlined_call_operand.vmem [shape: f32[16,1], index: 16, kind: input, shape index: {}]
  %s17 = inlined_call_operand.hbm [shape: f32[2,16,128], index: 17, kind: output, shape index: {}]
  %s18 = sld [smem:[#allocation0]]
  $region101: #{tpu_custom_call.1} parent=0
    _
  %s20 = ssub.s32 1, %s18
  %s21 = scalar_select 0, %s20, %s18
  $region1: #{tpu_custom_call.1} parent=0
    #allocation2 [shape = 'u8[16384]{0}', space=vmem, size = 0x4000, scoped, tag = 'output window, operand 0']
    #allocation3 [shape = 's32[2]{0}', space=sflag, size = 0x8, scoped, tag = 'scoped memory for tpu_custom_call.1']
    %22 = vsyncpa [#allocation3], 0
    %s23 = scalar_lea.sflag [#allocation3], 1
    %24 = vsyncpa %s23, 0
    loop: start=0, step=1, limit=4
    $region2: #{tpu_custom_call.1} parent=1 // loop_pre_header
      _
    $region3: #{tpu_custom_call.1} parent=1 // loop_header
      %s26 = sphi 0, %s30
      %p27 = scmp.ge.s32.totalorder %s26, 4
      %s36 = sphi 0, %s38
      %s39 = sphi 0, %s36
      %s40 = sphi 0, %s39
      %s56 = sphi 0, %s40
      %s60 = sphi 0, %s60
      %s62 = sphi 0, %s60
      %s63 = sphi 0, %s62
      %s77 = sphi 0, %s63
      %s81 = sphi 0, %s81
      %s83 = sphi 0, %s81
      %s84 = sphi 0, %s83
      %s98 = sphi 0, %s84
      %s102 = sphi 0, %s102
      %s104 = sphi 0, %s102
      %s105 = sphi 0, %s104
      %s119 = sphi 0, %s105
      %s123 = sphi 0, %s123
      %s125 = sphi 0, %s123
      %s126 = sphi 0, %s125
      %s140 = sphi 0, %s126
      %s144 = sphi 0, %s144
      %s146 = sphi 0, %s144
      %s147 = sphi 0, %s146
      %s161 = sphi 0, %s147
      %s165 = sphi 0, %s165
      %s167 = sphi 0, %s165
      %s168 = sphi 0, %s167
      %s182 = sphi 0, %s168
      %s186 = sphi 0, %s186
      %s188 = sphi 0, %s186
      %s189 = sphi 0, %s188
      %s203 = sphi 0, %s189
      %s207 = sphi 0, %s207
      %s209 = sphi 0, %s207
      %s210 = sphi 0, %s209
      %s224 = sphi 0, %s210
      %s228 = sphi 0, %s228
      %s230 = sphi 0, %s228
      %s231 = sphi 0, %s230
      %s245 = sphi 0, %s231
      %s249 = sphi 0, %s249
      %s251 = sphi 0, %s249
      %s252 = sphi 0, %s251
      %s266 = sphi 0, %s252
      %s270 = sphi 0, %s270
      %s272 = sphi 0, %s270
      %s273 = sphi 0, %s272
      %s287 = sphi 0, %s273
      %s291 = sphi 0, %s291
      %s293 = sphi 0, %s291
      %s294 = sphi 0, %s293
      %s308 = sphi 0, %s294
      %s312 = sphi 0, %s312
      %s314 = sphi 0, %s312
      %s315 = sphi 0, %s314
      %s329 = sphi 0, %s315
      %s333 = sphi 0, %s333
      %s335 = sphi 0, %s333
      %s336 = sphi 0, %s335
      %s350 = sphi 0, %s336
      %s354 = sphi 0, %s354
      %s356 = sphi 0, %s354
      %s357 = sphi 0, %s356
      %s371 = sphi 0, %s357
      %s375 = sphi 0, %s375
      %s377 = sphi 0, %s375
      %s378 = sphi 0, %s377
      %s392 = sphi 0, %s378
      %s398 = sphi 0, %s400
      %s401 = sphi 0, %s398
      %s402 = sphi 0, %s401
      %s418 = sphi 0, %s402
    $region4: #{tpu_custom_call.1} parent=1 // loop_header_branch
      %29 = sbr.rel (%p27) target = $region8
    $region5: #{tpu_custom_call.1} parent=1 // loop_body
      %s31 = ssub.s32 %s26, 1
      %s32 = ssub.s32 %s26, 2
      %s33 = sadd.s32 %s26, 1
      %s34 = ssub.s32 %s26, %s33
      %p35 = scmp.eq.s32.totalorder %s34, 0
      %s37 = sadd.s32 %s36, 1
      %s38 = scalar_select %p35, %s36, %s37
      %p41 = pneg %p35
      %p42 = scmp.eq.s32.totalorder %s26, 1
      %p43 = por %p41, %p42
      %p44 = scmp.ne.s32.totalorder %s36, %s39
      %p45 = scmp.eq.s32.totalorder %s26, 0
      %p46 = por %p44, %p45
      %p47 = scmp.ne.s32.totalorder %s36, %s39
      %p48 = scmp.eq.s32.totalorder %s31, 1
      %p49 = por %p47, %p48
      %p50 = scmp.ne.s32.totalorder %s39, %s40
      %p51 = scmp.eq.s32.totalorder %s31, 0
      %p52 = por %p50, %p51
      %p53 = scmp.ne.s32.totalorder %s39, %s40
      %p54 = scmp.eq.s32.totalorder %s32, 1
      %p55 = por %p53, %p54
      %p57 = scmp.ne.s32.totalorder %s40, %s56
      %p58 = scmp.eq.s32.totalorder %s32, 0
      %p59 = por %p57, %p58
      %s61 = sadd.s32 %s60, 1
      %p64 = scmp.eq.s32.totalorder %s26, 1
      %p65 = scmp.ne.s32.totalorder %s60, %s62
      %p66 = scmp.eq.s32.totalorder %s26, 0
      %p67 = por %p65, %p66
      %p68 = scmp.ne.s32.totalorder %s60, %s62
      %p69 = scmp.eq.s32.totalorder %s31, 1
      %p70 = por %p68, %p69
      %p71 = scmp.ne.s32.totalorder %s62, %s63
      %p72 = scmp.eq.s32.totalorder %s31, 0
      %p73 = por %p71, %p72
      %p74 = scmp.ne.s32.totalorder %s62, %s63
      %p75 = scmp.eq.s32.totalorder %s32, 1
      %p76 = por %p74, %p75
      %p78 = scmp.ne.s32.totalorder %s63, %s77
      %p79 = scmp.eq.s32.totalorder %s32, 0
      %p80 = por %p78, %p79
      %s82 = sadd.s32 %s81, 1
      %p85 = scmp.eq.s32.totalorder %s26, 1
      %p86 = scmp.ne.s32.totalorder %s81, %s83
      %p87 = scmp.eq.s32.totalorder %s26, 0
      %p88 = por %p86, %p87
      %p89 = scmp.ne.s32.totalorder %s81, %s83
      %p90 = scmp.eq.s32.totalorder %s31, 1
      %p91 = por %p89, %p90
      %p92 = scmp.ne.s32.totalorder %s83, %s84
      %p93 = scmp.eq.s32.totalorder %s31, 0
      %p94 = por %p92, %p93
      %p95 = scmp.ne.s32.totalorder %s83, %s84
      %p96 = scmp.eq.s32.totalorder %s32, 1
      %p97 = por %p95, %p96
      %p99 = scmp.ne.s32.totalorder %s84, %s98
      %p100 = scmp.eq.s32.totalorder %s32, 0
      %p101 = por %p99, %p100
      %s103 = sadd.s32 %s102, 1
      %p106 = scmp.eq.s32.totalorder %s26, 1
      %p107 = scmp.ne.s32.totalorder %s102, %s104
      %p108 = scmp.eq.s32.totalorder %s26, 0
      %p109 = por %p107, %p108
      %p110 = scmp.ne.s32.totalorder %s102, %s104
      %p111 = scmp.eq.s32.totalorder %s31, 1
      %p112 = por %p110, %p111
      %p113 = scmp.ne.s32.totalorder %s104, %s105
      %p114 = scmp.eq.s32.totalorder %s31, 0
      %p115 = por %p113, %p114
      %p116 = scmp.ne.s32.totalorder %s104, %s105
      %p117 = scmp.eq.s32.totalorder %s32, 1
      %p118 = por %p116, %p117
      %p120 = scmp.ne.s32.totalorder %s105, %s119
      %p121 = scmp.eq.s32.totalorder %s32, 0
      %p122 = por %p120, %p121
      %s124 = sadd.s32 %s123, 1
      %p127 = scmp.eq.s32.totalorder %s26, 1
      %p128 = scmp.ne.s32.totalorder %s123, %s125
      %p129 = scmp.eq.s32.totalorder %s26, 0
      %p130 = por %p128, %p129
      %p131 = scmp.ne.s32.totalorder %s123, %s125
      %p132 = scmp.eq.s32.totalorder %s31, 1
      %p133 = por %p131, %p132
      %p134 = scmp.ne.s32.totalorder %s125, %s126
      %p135 = scmp.eq.s32.totalorder %s31, 0
      %p136 = por %p134, %p135
      %p137 = scmp.ne.s32.totalorder %s125, %s126
      %p138 = scmp.eq.s32.totalorder %s32, 1
      %p139 = por %p137, %p138
      %p141 = scmp.ne.s32.totalorder %s126, %s140
      %p142 = scmp.eq.s32.totalorder %s32, 0
      %p143 = por %p141, %p142
      %s145 = sadd.s32 %s144, 1
      %p148 = scmp.eq.s32.totalorder %s26, 1
      %p149 = scmp.ne.s32.totalorder %s144, %s146
      %p150 = scmp.eq.s32.totalorder %s26, 0
      %p151 = por %p149, %p150
      %p152 = scmp.ne.s32.totalorder %s144, %s146
      %p153 = scmp.eq.s32.totalorder %s31, 1
      %p154 = por %p152, %p153
      %p155 = scmp.ne.s32.totalorder %s146, %s147
      %p156 = scmp.eq.s32.totalorder %s31, 0
      %p157 = por %p155, %p156
      %p158 = scmp.ne.s32.totalorder %s146, %s147
      %p159 = scmp.eq.s32.totalorder %s32, 1
      %p160 = por %p158, %p159
      %p162 = scmp.ne.s32.totalorder %s147, %s161
      %p163 = scmp.eq.s32.totalorder %s32, 0
      %p164 = por %p162, %p163
      %s166 = sadd.s32 %s165, 1
      %p169 = scmp.eq.s32.totalorder %s26, 1
      %p170 = scmp.ne.s32.totalorder %s165, %s167
      %p171 = scmp.eq.s32.totalorder %s26, 0
      %p172 = por %p170, %p171
      %p173 = scmp.ne.s32.totalorder %s165, %s167
      %p174 = scmp.eq.s32.totalorder %s31, 1
      %p175 = por %p173, %p174
      %p176 = scmp.ne.s32.totalorder %s167, %s168
      %p177 = scmp.eq.s32.totalorder %s31, 0
      %p178 = por %p176, %p177
      %p179 = scmp.ne.s32.totalorder %s167, %s168
      %p180 = scmp.eq.s32.totalorder %s32, 1
      %p181 = por %p179, %p180
      %p183 = scmp.ne.s32.totalorder %s168, %s182
      %p184 = scmp.eq.s32.totalorder %s32, 0
      %p185 = por %p183, %p184
      %s187 = sadd.s32 %s186, 1
      %p190 = scmp.eq.s32.totalorder %s26, 1
      %p191 = scmp.ne.s32.totalorder %s186, %s188
      %p192 = scmp.eq.s32.totalorder %s26, 0
      %p193 = por %p191, %p192
      %p194 = scmp.ne.s32.totalorder %s186, %s188
      %p195 = scmp.eq.s32.totalorder %s31, 1
      %p196 = por %p194, %p195
      %p197 = scmp.ne.s32.totalorder %s188, %s189
      %p198 = scmp.eq.s32.totalorder %s31, 0
      %p199 = por %p197, %p198
      %p200 = scmp.ne.s32.totalorder %s188, %s189
      %p201 = scmp.eq.s32.totalorder %s32, 1
      %p202 = por %p200, %p201
      %p204 = scmp.ne.s32.totalorder %s189, %s203
      %p205 = scmp.eq.s32.totalorder %s32, 0
      %p206 = por %p204, %p205
      %s208 = sadd.s32 %s207, 1
      %p211 = scmp.eq.s32.totalorder %s26, 1
      %p212 = scmp.ne.s32.totalorder %s207, %s209
      %p213 = scmp.eq.s32.totalorder %s26, 0
      %p214 = por %p212, %p213
      %p215 = scmp.ne.s32.totalorder %s207, %s209
      %p216 = scmp.eq.s32.totalorder %s31, 1
      %p217 = por %p215, %p216
      %p218 = scmp.ne.s32.totalorder %s209, %s210
      %p219 = scmp.eq.s32.totalorder %s31, 0
      %p220 = por %p218, %p219
      %p221 = scmp.ne.s32.totalorder %s209, %s210
      %p222 = scmp.eq.s32.totalorder %s32, 1
      %p223 = por %p221, %p222
      %p225 = scmp.ne.s32.totalorder %s210, %s224
      %p226 = scmp.eq.s32.totalorder %s32, 0
      %p227 = por %p225, %p226
      %s229 = sadd.s32 %s228, 1
      %p232 = scmp.eq.s32.totalorder %s26, 1
      %p233 = scmp.ne.s32.totalorder %s228, %s230
      %p234 = scmp.eq.s32.totalorder %s26, 0
      %p235 = por %p233, %p234
      %p236 = scmp.ne.s32.totalorder %s228, %s230
      %p237 = scmp.eq.s32.totalorder %s31, 1
      %p238 = por %p236, %p237
      %p239 = scmp.ne.s32.totalorder %s230, %s231
      %p240 = scmp.eq.s32.totalorder %s31, 0
      %p241 = por %p239, %p240
      %p242 = scmp.ne.s32.totalorder %s230, %s231
      %p243 = scmp.eq.s32.totalorder %s32, 1
      %p244 = por %p242, %p243
      %p246 = scmp.ne.s32.totalorder %s231, %s245
      %p247 = scmp.eq.s32.totalorder %s32, 0
      %p248 = por %p246, %p247
      %s250 = sadd.s32 %s249, 1
      %p253 = scmp.eq.s32.totalorder %s26, 1
      %p254 = scmp.ne.s32.totalorder %s249, %s251
      %p255 = scmp.eq.s32.totalorder %s26, 0
      %p256 = por %p254, %p255
      %p257 = scmp.ne.s32.totalorder %s249, %s251
      %p258 = scmp.eq.s32.totalorder %s31, 1
      %p259 = por %p257, %p258
      %p260 = scmp.ne.s32.totalorder %s251, %s252
      %p261 = scmp.eq.s32.totalorder %s31, 0
      %p262 = por %p260, %p261
      %p263 = scmp.ne.s32.totalorder %s251, %s252
      %p264 = scmp.eq.s32.totalorder %s32, 1
      %p265 = por %p263, %p264
      %p267 = scmp.ne.s32.totalorder %s252, %s266
      %p268 = scmp.eq.s32.totalorder %s32, 0
      %p269 = por %p267, %p268
      %s271 = sadd.s32 %s270, 1
      %p274 = scmp.eq.s32.totalorder %s26, 1
      %p275 = scmp.ne.s32.totalorder %s270, %s272
      %p276 = scmp.eq.s32.totalorder %s26, 0
      %p277 = por %p275, %p276
      %p278 = scmp.ne.s32.totalorder %s270, %s272
      %p279 = scmp.eq.s32.totalorder %s31, 1
      %p280 = por %p278, %p279
      %p281 = scmp.ne.s32.totalorder %s272, %s273
      %p282 = scmp.eq.s32.totalorder %s31, 0
      %p283 = por %p281, %p282
      %p284 = scmp.ne.s32.totalorder %s272, %s273
      %p285 = scmp.eq.s32.totalorder %s32, 1
      %p286 = por %p284, %p285
      %p288 = scmp.ne.s32.totalorder %s273, %s287
      %p289 = scmp.eq.s32.totalorder %s32, 0
      %p290 = por %p288, %p289
      %s292 = sadd.s32 %s291, 1
      %p295 = scmp.eq.s32.totalorder %s26, 1
      %p296 = scmp.ne.s32.totalorder %s291, %s293
      %p297 = scmp.eq.s32.totalorder %s26, 0
      %p298 = por %p296, %p297
      %p299 = scmp.ne.s32.totalorder %s291, %s293
      %p300 = scmp.eq.s32.totalorder %s31, 1
      %p301 = por %p299, %p300
      %p302 = scmp.ne.s32.totalorder %s293, %s294
      %p303 = scmp.eq.s32.totalorder %s31, 0
      %p304 = por %p302, %p303
      %p305 = scmp.ne.s32.totalorder %s293, %s294
      %p306 = scmp.eq.s32.totalorder %s32, 1
      %p307 = por %p305, %p306
      %p309 = scmp.ne.s32.totalorder %s294, %s308
      %p310 = scmp.eq.s32.totalorder %s32, 0
      %p311 = por %p309, %p310
      %s313 = sadd.s32 %s312, 1
      %p316 = scmp.eq.s32.totalorder %s26, 1
      %p317 = scmp.ne.s32.totalorder %s312, %s314
      %p318 = scmp.eq.s32.totalorder %s26, 0
      %p319 = por %p317, %p318
      %p320 = scmp.ne.s32.totalorder %s312, %s314
      %p321 = scmp.eq.s32.totalorder %s31, 1
      %p322 = por %p320, %p321
      %p323 = scmp.ne.s32.totalorder %s314, %s315
      %p324 = scmp.eq.s32.totalorder %s31, 0
      %p325 = por %p323, %p324
      %p326 = scmp.ne.s32.totalorder %s314, %s315
      %p327 = scmp.eq.s32.totalorder %s32, 1
      %p328 = por %p326, %p327
      %p330 = scmp.ne.s32.totalorder %s315, %s329
      %p331 = scmp.eq.s32.totalorder %s32, 0
      %p332 = por %p330, %p331
      %s334 = sadd.s32 %s333, 1
      %p337 = scmp.eq.s32.totalorder %s26, 1
      %p338 = scmp.ne.s32.totalorder %s333, %s335
      %p339 = scmp.eq.s32.totalorder %s26, 0
      %p340 = por %p338, %p339
      %p341 = scmp.ne.s32.totalorder %s333, %s335
      %p342 = scmp.eq.s32.totalorder %s31, 1
      %p343 = por %p341, %p342
      %p344 = scmp.ne.s32.totalorder %s335, %s336
      %p345 = scmp.eq.s32.totalorder %s31, 0
      %p346 = por %p344, %p345
      %p347 = scmp.ne.s32.totalorder %s335, %s336
      %p348 = scmp.eq.s32.totalorder %s32, 1
      %p349 = por %p347, %p348
      %p351 = scmp.ne.s32.totalorder %s336, %s350
      %p352 = scmp.eq.s32.totalorder %s32, 0
      %p353 = por %p351, %p352
      %s355 = sadd.s32 %s354, 1
      %p358 = scmp.eq.s32.totalorder %s26, 1
      %p359 = scmp.ne.s32.totalorder %s354, %s356
      %p360 = scmp.eq.s32.totalorder %s26, 0
      %p361 = por %p359, %p360
      %p362 = scmp.ne.s32.totalorder %s354, %s356
      %p363 = scmp.eq.s32.totalorder %s31, 1
      %p364 = por %p362, %p363
      %p365 = scmp.ne.s32.totalorder %s356, %s357
      %p366 = scmp.eq.s32.totalorder %s31, 0
      %p367 = por %p365, %p366
      %p368 = scmp.ne.s32.totalorder %s356, %s357
      %p369 = scmp.eq.s32.totalorder %s32, 1
      %p370 = por %p368, %p369
      %p372 = scmp.ne.s32.totalorder %s357, %s371
      %p373 = scmp.eq.s32.totalorder %s32, 0
      %p374 = por %p372, %p373
      %s376 = sadd.s32 %s375, 1
      %p379 = scmp.eq.s32.totalorder %s26, 1
      %p380 = scmp.ne.s32.totalorder %s375, %s377
      %p381 = scmp.eq.s32.totalorder %s26, 0
      %p382 = por %p380, %p381
      %p383 = scmp.ne.s32.totalorder %s375, %s377
      %p384 = scmp.eq.s32.totalorder %s31, 1
      %p385 = por %p383, %p384
      %p386 = scmp.ne.s32.totalorder %s377, %s378
      %p387 = scmp.eq.s32.totalorder %s31, 0
      %p388 = por %p386, %p387
      %p389 = scmp.ne.s32.totalorder %s377, %s378
      %p390 = scmp.eq.s32.totalorder %s32, 1
      %p391 = por %p389, %p390
      %p393 = scmp.ne.s32.totalorder %s378, %s392
      %p394 = scmp.eq.s32.totalorder %s32, 0
      %p395 = por %p393, %p394
      %s396 = ssub.s32 %s26, %s33
      %p397 = scmp.eq.s32.totalorder %s396, 0
      %s399 = sadd.s32 %s398, 1
      %s400 = scalar_select %p397, %s398, %s399
      %p403 = pneg %p397
      %p404 = scmp.eq.s32.totalorder %s26, 1
      %p405 = por %p403, %p404
      %p406 = scmp.ne.s32.totalorder %s398, %s401
      %p407 = scmp.eq.s32.totalorder %s26, 0
      %p408 = por %p406, %p407
      %p409 = scmp.ne.s32.totalorder %s398, %s401
      %p410 = scmp.eq.s32.totalorder %s31, 1
      %p411 = por %p409, %p410
      %p412 = scmp.ne.s32.totalorder %s401, %s402
      %p413 = scmp.eq.s32.totalorder %s31, 0
      %p414 = por %p412, %p413
      %p415 = scmp.ne.s32.totalorder %s401, %s402
      %p416 = scmp.eq.s32.totalorder %s32, 1
      %p417 = por %p415, %p416
      %p419 = scmp.ne.s32.totalorder %s402, %s418
      %p420 = scmp.eq.s32.totalorder %s32, 0
      %p421 = por %p419, %p420
      %p422 = scmp.le.s32.totalorder 1, %s26
      %p423 = scmp.lt.s32.totalorder %s26, 3
      %p424 = pnand %p422, %p423
      %p425 = pneg %p424
      // Predicated region
      $region9: #{tpu_custom_call.1} parent=5 // pred_check
        _
      $region10: #{tpu_custom_call.1} parent=5 // pred_check_branch
        %427 = sbr.rel (%p424) target = $region12
      $region11: #{tpu_custom_call.1} parent=5 // pred_region
        %s428 = ssub.s32 %s26, 1
        // Predicated region
        $region13: #{tpu_custom_call.1} parent=11 // pred_check
          %p429 = pneg %p73
        $region14: #{tpu_custom_call.1} parent=11 // pred_check_branch
          %431 = sbr.rel (%p429) target = $region16
        $region15: #{tpu_custom_call.1} parent=11 // pred_region
          _
        $region16: #{tpu_custom_call.1} parent=11 // pred_fallthru
          _
        // Predicated region
        $region17: #{tpu_custom_call.1} parent=11 // pred_check
          %p432 = pneg %p94
        $region18: #{tpu_custom_call.1} parent=11 // pred_check_branch
          %434 = sbr.rel (%p432) target = $region20
        $region19: #{tpu_custom_call.1} parent=11 // pred_region
          _
        $region20: #{tpu_custom_call.1} parent=11 // pred_fallthru
          _
        // Predicated region
        $region21: #{tpu_custom_call.1} parent=11 // pred_check
          %p435 = pneg %p115
        $region22: #{tpu_custom_call.1} parent=11 // pred_check_branch
          %437 = sbr.rel (%p435) target = $region24
        $region23: #{tpu_custom_call.1} parent=11 // pred_region
          _
        $region24: #{tpu_custom_call.1} parent=11 // pred_fallthru
          _
        // Predicated region
        $region25: #{tpu_custom_call.1} parent=11 // pred_check
          %p438 = pneg %p136
        $region26: #{tpu_custom_call.1} parent=11 // pred_check_branch
          %440 = sbr.rel (%p438) target = $region28
        $region27: #{tpu_custom_call.1} parent=11 // pred_region
          _
        $region28: #{tpu_custom_call.1} parent=11 // pred_fallthru
          _
        // Predicated region
        $region29: #{tpu_custom_call.1} parent=11 // pred_check
          %p441 = pneg %p157
        $region30: #{tpu_custom_call.1} parent=11 // pred_check_branch
          %443 = sbr.rel (%p441) target = $region32
        $region31: #{tpu_custom_call.1} parent=11 // pred_region
          _
        $region32: #{tpu_custom_call.1} parent=11 // pred_fallthru
          _
        // Predicated region
        $region33: #{tpu_custom_call.1} parent=11 // pred_check
          %p444 = pneg %p178
        $region34: #{tpu_custom_call.1} parent=11 // pred_check_branch
          %446 = sbr.rel (%p444) target = $region36
        $region35: #{tpu_custom_call.1} parent=11 // pred_region
          _
        $region36: #{tpu_custom_call.1} parent=11 // pred_fallthru
          _
        // Predicated region
        $region37: #{tpu_custom_call.1} parent=11 // pred_check
          %p447 = pneg %p199
        $region38: #{tpu_custom_call.1} parent=11 // pred_check_branch
          %449 = sbr.rel (%p447) target = $region40
        $region39: #{tpu_custom_call.1} parent=11 // pred_region
          _
        $region40: #{tpu_custom_call.1} parent=11 // pred_fallthru
          _
        // Predicated region
        $region41: #{tpu_custom_call.1} parent=11 // pred_check
          %p450 = pneg %p220
        $region42: #{tpu_custom_call.1} parent=11 // pred_check_branch
          %452 = sbr.rel (%p450) target = $region44
        $region43: #{tpu_custom_call.1} parent=11 // pred_region
          _
        $region44: #{tpu_custom_call.1} parent=11 // pred_fallthru
          _
        // Predicated region
        $region45: #{tpu_custom_call.1} parent=11 // pred_check
          %p453 = pneg %p241
        $region46: #{tpu_custom_call.1} parent=11 // pred_check_branch
          %455 = sbr.rel (%p453) target = $region48
        $region47: #{tpu_custom_call.1} parent=11 // pred_region
          _
        $region48: #{tpu_custom_call.1} parent=11 // pred_fallthru
          _
        // Predicated region
        $region49: #{tpu_custom_call.1} parent=11 // pred_check
          %p456 = pneg %p262
        $region50: #{tpu_custom_call.1} parent=11 // pred_check_branch
          %458 = sbr.rel (%p456) target = $region52
        $region51: #{tpu_custom_call.1} parent=11 // pred_region
          _
        $region52: #{tpu_custom_call.1} parent=11 // pred_fallthru
          _
        // Predicated region
        $region53: #{tpu_custom_call.1} parent=11 // pred_check
          %p459 = pneg %p283
        $region54: #{tpu_custom_call.1} parent=11 // pred_check_branch
          %461 = sbr.rel (%p459) target = $region56
        $region55: #{tpu_custom_call.1} parent=11 // pred_region
          _
        $region56: #{tpu_custom_call.1} parent=11 // pred_fallthru
          _
        // Predicated region
        $region57: #{tpu_custom_call.1} parent=11 // pred_check
          %p462 = pneg %p304
        $region58: #{tpu_custom_call.1} parent=11 // pred_check_branch
          %464 = sbr.rel (%p462) target = $region60
        $region59: #{tpu_custom_call.1} parent=11 // pred_region
          _
        $region60: #{tpu_custom_call.1} parent=11 // pred_fallthru
          _
        // Predicated region
        $region61: #{tpu_custom_call.1} parent=11 // pred_check
          %p465 = pneg %p325
        $region62: #{tpu_custom_call.1} parent=11 // pred_check_branch
          %467 = sbr.rel (%p465) target = $region64
        $region63: #{tpu_custom_call.1} parent=11 // pred_region
          _
        $region64: #{tpu_custom_call.1} parent=11 // pred_fallthru
          _
        // Predicated region
        $region65: #{tpu_custom_call.1} parent=11 // pred_check
          %p468 = pneg %p346
        $region66: #{tpu_custom_call.1} parent=11 // pred_check_branch
          %470 = sbr.rel (%p468) target = $region68
        $region67: #{tpu_custom_call.1} parent=11 // pred_region
          _
        $region68: #{tpu_custom_call.1} parent=11 // pred_fallthru
          _
        // Predicated region
        $region69: #{tpu_custom_call.1} parent=11 // pred_check
          %p471 = pneg %p367
        $region70: #{tpu_custom_call.1} parent=11 // pred_check_branch
          %473 = sbr.rel (%p471) target = $region72
        $region71: #{tpu_custom_call.1} parent=11 // pred_region
          _
        $region72: #{tpu_custom_call.1} parent=11 // pred_fallthru
          _
        // Predicated region
        $region73: #{tpu_custom_call.1} parent=11 // pred_check
          %p474 = pneg %p388
        $region74: #{tpu_custom_call.1} parent=11 // pred_check_branch
          %476 = sbr.rel (%p474) target = $region76
        $region75: #{tpu_custom_call.1} parent=11 // pred_region
          _
        $region76: #{tpu_custom_call.1} parent=11 // pred_fallthru
          _
      $region12: #{tpu_custom_call.1} parent=5 // pred_fallthru
        _
      %p477 = scmp.lt.s32.totalorder %s26, 2
      // Predicated region
      $region77: #{tpu_custom_call.1} parent=5 // pred_check
        %p478 = pneg %p477
      $region78: #{tpu_custom_call.1} parent=5 // pred_check_branch
        %480 = sbr.rel (%p478) target = $region80
      $region79: #{tpu_custom_call.1} parent=5 // pred_region
        // Predicated region
        $region81: #{tpu_custom_call.1} parent=79 // pred_check
          %p481 = pneg %p46
        $region82: #{tpu_custom_call.1} parent=79 // pred_check_branch
          %483 = sbr.rel (%p481) target = $region84
        $region83: #{tpu_custom_call.1} parent=79 // pred_region
          %p484 = scmp.lt.s32.totalorder %s26, 1
          %s485 = scalar_select %p484, %s26, 1
          %s486 = smul.addr %s485, 4
          %s487 = scalar_lea.vmem %s0, %s486
        $region84: #{tpu_custom_call.1} parent=79 // pred_fallthru
          _
      $region80: #{tpu_custom_call.1} parent=5 // pred_fallthru
        _
      %p488 = scmp.le.s32.totalorder 1, %s26
      %p489 = scmp.lt.s32.totalorder %s26, 3
      %p490 = pnand %p488, %p489
      %p491 = pneg %p490
      // Predicated region
      $region85: #{tpu_custom_call.1} parent=5 // pred_check
        _
      $region86: #{tpu_custom_call.1} parent=5 // pred_check_branch
        %493 = sbr.rel (%p490) target = $region88
      $region87: #{tpu_custom_call.1} parent=5 // pred_region
        %s494 = ssub.s32 %s26, 1
        %p495 = scmp.lt.s32.totalorder %s31, 1
        %s496 = scalar_select %p495, %s31, 1
        %s497 = smul.addr %s496, 4
        %s498 = scalar_lea.vmem %s0, %s497
        %p499 = pneg %p52
        %p500 = pneg %p49
        %p501 = pneg %p73
        %p502 = pneg %p70
        %p503 = pneg %p94
        %p504 = pneg %p91
        %p505 = pneg %p115
        %p506 = pneg %p112
        %p507 = pneg %p136
        %p508 = pneg %p133
        %p509 = pneg %p157
        %p510 = pneg %p154
        %p511 = pneg %p178
        %p512 = pneg %p175
        %p513 = pneg %p199
        %p514 = pneg %p196
        %p515 = pneg %p220
        %p516 = pneg %p217
        %p517 = pneg %p241
        %p518 = pneg %p238
        %p519 = pneg %p262
        %p520 = pneg %p259
        %p521 = pneg %p283
        %p522 = pneg %p280
        %p523 = pneg %p304
        %p524 = pneg %p301
        %p525 = pneg %p325
        %p526 = pneg %p322
        %p527 = pneg %p346
        %p528 = pneg %p343
        %p529 = pneg %p367
        %p530 = pneg %p364
        %p531 = pneg %p388
        %p532 = pneg %p385
        %p533 = pneg %p414
        %p534 = pneg %p411
        %s535 = sand.u32 %s401, 1
        %s536 = scalar_lea.sflag [#allocation3], %s535
        %s537 = sand.u32 %s401, 1
        %s538 = smul.addr %s537, 16
        %s539 = scalar_lea.vmem [#allocation2], %s538
        %p540 = scmp.lt.s32.totalorder %s31, 1
        %s541 = scalar_select %p540, %s31, 1
        %s542 = smul.addr %s541, 4
        %s543 = scalar_lea.vmem %s0, %s542
        %v545 = vlaneseq
        %v546 = vand.u32 %v545, 127
        %v547 = vld [vmem:[%s543] sm:$0xf]
        %vm548 = vcmp.ge.s32.totalorder %v546, 1
        %549 = vrot.lane.b32.xlu0 %v547, 1
        %v550 = vpop.permute.xlu0 %549
        %v551 = vsel %vm548, 1, 0
        %vm552 = vcmp.eq.s32.totalorder %v551, 1
        %v553 = vsel %vm552, %v550, 0.0
        %v554 = vpack.c.bf16 %v553, %v553
        %v555 = vld [vmem:[%s1] sm:$0xf]
        %v556 = vpack.c.bf16 %v547, %v547
        %s557 = scalar_lea.vmem %s1, 4
        %v558 = vld [vmem:[%s557] sm:$0xf]
        %vm559 = vcmask 31744
        %v561 = vsel %vm559, %v558, 0
        %vm563 = vcmask 1041408
        %v565 = vsel %vm563, %v556, 0
        %567 = vmatprep.subr.bf16.mxu0 0
        %568 = vmatpush1.bf16.msra.mxu0 %v565
        %569 = vmatprep.subr.bf16.mxu0 0
        %570 = vmatpush1.bf16.msra.mxu0 0
        %571 = vmatprep.subr.bf16.mxu0 0
        %572 = vmatpush1.bf16.msra.mxu0 0
        %573 = vmatprep.subr.bf16.mxu0 0
        %574 = vmatpush1.bf16.msra.mxu0 0
        %575 = vmatprep.subr.bf16.mxu0 0
        %576 = vmatpush1.bf16.msra.mxu0 0
        %577 = vmatprep.subr.bf16.mxu0 0
        %578 = vmatpush1.bf16.msra.mxu0 0
        %579 = vmatprep.subr.bf16.mxu0 0
        %580 = vmatpush1.bf16.msra.mxu0 0
        %581 = vmatprep.subr.bf16.mxu0 0
        %582 = vmatpush1.bf16.msra.mxu0 0
        %583 = vmatprep.subr.bf16.mxu0 0
        %584 = vmatpush1.bf16.msra.mxu0 0
        %585 = vmatprep.subr.bf16.mxu0 0
        %586 = vmatpush1.bf16.msra.mxu0 0
        %587 = vmatprep.subr.bf16.mxu0 0
        %588 = vmatpush1.bf16.msra.mxu0 0
        %589 = vmatprep.subr.bf16.mxu0 0
        %590 = vmatpush1.bf16.msra.mxu0 0
        %591 = vmatprep.subr.bf16.mxu0 0
        %592 = vmatpush1.bf16.msra.mxu0 0
        %593 = vmatprep.subr.bf16.mxu0 0
        %594 = vmatpush1.bf16.msra.mxu0 0
        %595 = vmatprep.subr.bf16.mxu0 0
        %596 = vmatpush1.bf16.msra.mxu0 0
        %597 = vmatprep.subr.bf16.mxu0 0
        %598 = vmatpush1.bf16.msra.mxu0 0
        %599 = vmatprep.mubr.bf16.mxu0 0
        %600 = vmatmul.mubr.bf16.gmra.mrb[0].mxu0 %v561
        %v601 = vpop.f32.mrb[0].mxu0
        %v602 = vadd.f32 0.0, %v601
        %v603 = vpop.f32.mrb[0].mxu0
        %v604 = vpop.f32.mrb[0].mxu0
        %v605 = vpop.f32.mrb[0].mxu0
        %606 = vdwg.mxu0
        %v608 = vsel %vm559, %v555, 0
        %v611 = vsel %vm563, %v554, 0
        %613 = vmatprep.subr.bf16.mxu0 0
        %614 = vmatpush1.bf16.msra.mxu0 %v611
        %615 = vmatprep.subr.bf16.mxu0 0
        %616 = vmatpush1.bf16.msra.mxu0 0
        %617 = vmatprep.subr.bf16.mxu0 0
        %618 = vmatpush1.bf16.msra.mxu0 0
        %619 = vmatprep.subr.bf16.mxu0 0
        %620 = vmatpush1.bf16.msra.mxu0 0
        %621 = vmatprep.subr.bf16.mxu0 0
        %622 = vmatpush1.bf16.msra.mxu0 0
        %623 = vmatprep.subr.bf16.mxu0 0
        %624 = vmatpush1.bf16.msra.mxu0 0
        %625 = vmatprep.subr.bf16.mxu0 0
        %626 = vmatpush1.bf16.msra.mxu0 0
        %627 = vmatprep.subr.bf16.mxu0 0
        %628 = vmatpush1.bf16.msra.mxu0 0
        %629 = vmatprep.subr.bf16.mxu0 0
        %630 = vmatpush1.bf16.msra.mxu0 0
        %631 = vmatprep.subr.bf16.mxu0 0
        %632 = vmatpush1.bf16.msra.mxu0 0
        %633 = vmatprep.subr.bf16.mxu0 0
        %634 = vmatpush1.bf16.msra.mxu0 0
        %635 = vmatprep.subr.bf16.mxu0 0
        %636 = vmatpush1.bf16.msra.mxu0 0
        %637 = vmatprep.subr.bf16.mxu0 0
        %638 = vmatpush1.bf16.msra.mxu0 0
        %639 = vmatprep.subr.bf16.mxu0 0
        %640 = vmatpush1.bf16.msra.mxu0 0
        %641 = vmatprep.subr.bf16.mxu0 0
        %642 = vmatpush1.bf16.msra.mxu0 0
        %643 = vmatprep.subr.bf16.mxu0 0
        %644 = vmatpush1.bf16.msra.mxu0 0
        %645 = vmatprep.mubr.bf16.mxu0 0
        %646 = vmatmul.mubr.bf16.gmra.mrb[0].mxu0 %v608
        %v647 = vpop.f32.mrb[0].mxu0
        %v648 = vadd.f32 %v602, %v647
        %v649 = vpop.f32.mrb[0].mxu0
        %v650 = vpop.f32.mrb[0].mxu0
        %v651 = vpop.f32.mrb[0].mxu0
        %652 = vdwg.mxu0
        %v653 = vld [vmem:[%s2] sm:$0xff]
        %655 = vset.pattern.permute.xlu0 0
        %656 = vperm.xlu0 %655, %v653
        %v657 = vpop.permute.xlu0 %656
        %v659 = vadd.f32 %v648, %v657
        %v660 = vmul.f32 %v659, 0.01
        %v661 = vmax.f32 %v659, %v660
        %662 = vrot.lane.b32.xlu0 %v661, 1
        %v663 = vpop.permute.xlu0 %662
        %v664 = vsel %vm552, %v663, 0.0
        %v665 = vpack.c.bf16 %v664, %v664
        %v666 = vld [vmem:[%s3] sm:$0xf]
        %v667 = vpack.c.bf16 %v661, %v661
        %s668 = scalar_lea.vmem %s3, 4
        %v669 = vld [vmem:[%s668] sm:$0xf]
        %vm670 = vcmask 64512
        %v672 = vsel %vm670, %v669, 0
        %vm674 = vcmask 1043456
        %v676 = vsel %vm674, %v667, 0
        %678 = vmatprep.subr.bf16.mxu0 0
        %679 = vmatpush1.bf16.msra.mxu0 %v676
        %680 = vmatprep.subr.bf16.mxu0 0
        %681 = vmatpush1.bf16.msra.mxu0 0
        %682 = vmatprep.subr.bf16.mxu0 0
        %683 = vmatpush1.bf16.msra.mxu0 0
        %684 = vmatprep.subr.bf16.mxu0 0
        %685 = vmatpush1.bf16.msra.mxu0 0
        %686 = vmatprep.subr.bf16.mxu0 0
        %687 = vmatpush1.bf16.msra.mxu0 0
        %688 = vmatprep.subr.bf16.mxu0 0
        %689 = vmatpush1.bf16.msra.mxu0 0
        %690 = vmatprep.subr.bf16.mxu0 0
        %691 = vmatpush1.bf16.msra.mxu0 0
        %692 = vmatprep.subr.bf16.mxu0 0
        %693 = vmatpush1.bf16.msra.mxu0 0
        %694 = vmatprep.subr.bf16.mxu0 0
        %695 = vmatpush1.bf16.msra.mxu0 0
        %696 = vmatprep.subr.bf16.mxu0 0
        %697 = vmatpush1.bf16.msra.mxu0 0
        %698 = vmatprep.subr.bf16.mxu0 0
        %699 = vmatpush1.bf16.msra.mxu0 0
        %700 = vmatprep.subr.bf16.mxu0 0
        %701 = vmatpush1.bf16.msra.mxu0 0
        %702 = vmatprep.subr.bf16.mxu0 0
        %703 = vmatpush1.bf16.msra.mxu0 0
        %704 = vmatprep.subr.bf16.mxu0 0
        %705 = vmatpush1.bf16.msra.mxu0 0
        %706 = vmatprep.subr.bf16.mxu0 0
        %707 = vmatpush1.bf16.msra.mxu0 0
        %708 = vmatprep.subr.bf16.mxu0 0
        %709 = vmatpush1.bf16.msra.mxu0 0
        %710 = vmatprep.mubr.bf16.mxu0 0
        %711 = vmatmul.mubr.bf16.gmra.mrb[0].mxu0 %v672
        %v712 = vpop.f32.mrb[0].mxu0
        %v713 = vadd.f32 0.0, %v712
        %v714 = vpop.f32.mrb[0].mxu0
        %v715 = vpop.f32.mrb[0].mxu0
        %v716 = vpop.f32.mrb[0].mxu0
        %717 = vdwg.mxu0
        %v719 = vsel %vm670, %v666, 0
        %v722 = vsel %vm674, %v665, 0
        %724 = vmatprep.subr.bf16.mxu0 0
        %725 = vmatpush1.bf16.msra.mxu0 %v722
        %726 = vmatprep.subr.bf16.mxu0 0
        %727 = vmatpush1.bf16.msra.mxu0 0
        %728 = vmatprep.subr.bf16.mxu0 0
        %729 = vmatpush1.bf16.msra.mxu0 0
        %730 = vmatprep.subr.bf16.mxu0 0
        %731 = vmatpush1.bf16.msra.mxu0 0
        %732 = vmatprep.subr.bf16.mxu0 0
        %733 = vmatpush1.bf16.msra.mxu0 0
        %734 = vmatprep.subr.bf16.mxu0 0
        %735 = vmatpush1.bf16.msra.mxu0 0
        %736 = vmatprep.subr.bf16.mxu0 0
        %737 = vmatpush1.bf16.msra.mxu0 0
        %738 = vmatprep.subr.bf16.mxu0 0
        %739 = vmatpush1.bf16.msra.mxu0 0
        %740 = vmatprep.subr.bf16.mxu0 0
        %741 = vmatpush1.bf16.msra.mxu0 0
        %742 = vmatprep.subr.bf16.mxu0 0
        %743 = vmatpush1.bf16.msra.mxu0 0
        %744 = vmatprep.subr.bf16.mxu0 0
        %745 = vmatpush1.bf16.msra.mxu0 0
        %746 = vmatprep.subr.bf16.mxu0 0
        %747 = vmatpush1.bf16.msra.mxu0 0
        %748 = vmatprep.subr.bf16.mxu0 0
        %749 = vmatpush1.bf16.msra.mxu0 0
        %750 = vmatprep.subr.bf16.mxu0 0
        %751 = vmatpush1.bf16.msra.mxu0 0
        %752 = vmatprep.subr.bf16.mxu0 0
        %753 = vmatpush1.bf16.msra.mxu0 0
        %754 = vmatprep.subr.bf16.mxu0 0
        %755 = vmatpush1.bf16.msra.mxu0 0
        %756 = vmatprep.mubr.bf16.mxu0 0
        %757 = vmatmul.mubr.bf16.gmra.mrb[0].mxu0 %v719
        %v758 = vpop.f32.mrb[0].mxu0
        %v759 = vadd.f32 %v713, %v758
        %v760 = vpop.f32.mrb[0].mxu0
        %v761 = vpop.f32.mrb[0].mxu0
        %v762 = vpop.f32.mrb[0].mxu0
        %763 = vdwg.mxu0
        %v764 = vld [vmem:[%s4] sm:$0xff]
        %766 = vset.pattern.permute.xlu0 0
        %767 = vperm.xlu0 %766, %v764
        %v768 = vpop.permute.xlu0 %767
        %v770 = vadd.f32 %v759, %v768
        %v771 = vmul.f32 %v770, 0.01
        %v772 = vmax.f32 %v770, %v771
        %v773 = vld [vmem:[%s5] sm:$0xf]
        %v774 = vld [vmem:[%s6] sm:$0xff]
        %776 = vset.pattern.permute.xlu0 0
        %777 = vperm.xlu0 %776, %v774
        %v778 = vpop.permute.xlu0 %777
        %v781 = vsel %vm559, %v773, 0
        %783 = vmatprep.subr.bf16.mxu0 0
        %784 = vmatpush1.bf16.msra.mxu0 %v565
        %785 = vmatprep.subr.bf16.mxu0 0
        %786 = vmatpush1.bf16.msra.mxu0 0
        %787 = vmatprep.subr.bf16.mxu0 0
        %788 = vmatpush1.bf16.msra.mxu0 0
        %789 = vmatprep.subr.bf16.mxu0 0
        %790 = vmatpush1.bf16.msra.mxu0 0
        %791 = vmatprep.subr.bf16.mxu0 0
        %792 = vmatpush1.bf16.msra.mxu0 0
        %793 = vmatprep.subr.bf16.mxu0 0
        %794 = vmatpush1.bf16.msra.mxu0 0
        %795 = vmatprep.subr.bf16.mxu0 0
        %796 = vmatpush1.bf16.msra.mxu0 0
        %797 = vmatprep.subr.bf16.mxu0 0
        %798 = vmatpush1.bf16.msra.mxu0 0
        %799 = vmatprep.subr.bf16.mxu0 0
        %800 = vmatpush1.bf16.msra.mxu0 0
        %801 = vmatprep.subr.bf16.mxu0 0
        %802 = vmatpush1.bf16.msra.mxu0 0
        %803 = vmatprep.subr.bf16.mxu0 0
        %804 = vmatpush1.bf16.msra.mxu0 0
        %805 = vmatprep.subr.bf16.mxu0 0
        %806 = vmatpush1.bf16.msra.mxu0 0
        %807 = vmatprep.subr.bf16.mxu0 0
        %808 = vmatpush1.bf16.msra.mxu0 0
        %809 = vmatprep.subr.bf16.mxu0 0
        %810 = vmatpush1.bf16.msra.mxu0 0
        %811 = vmatprep.subr.bf16.mxu0 0
        %812 = vmatpush1.bf16.msra.mxu0 0
        %813 = vmatprep.subr.bf16.mxu0 0
        %814 = vmatpush1.bf16.msra.mxu0 0
        %815 = vmatprep.mubr.bf16.mxu0 0
        %816 = vmatmul.mubr.bf16.gmra.mrb[0].mxu0 %v781
        %v817 = vpop.f32.mrb[0].mxu0
        %v818 = vadd.f32 %v778, %v817
        %v819 = vpop.f32.mrb[0].mxu0
        %v820 = vpop.f32.mrb[0].mxu0
        %v821 = vpop.f32.mrb[0].mxu0
        %822 = vdwg.mxu0
        %v823 = vadd.f32 %v772, %v818
        %v824 = vmul.f32 %v823, 0.01
        %v825 = vmax.f32 %v823, %v824
        %vm826 = vcmp.ge.s32.totalorder %v546, 2
        %827 = vrot.lane.b32.xlu0 %v825, 2
        %v828 = vpop.permute.xlu0 %827
        %v829 = vsel %vm826, 1, 0
        %vm830 = vcmp.eq.s32.totalorder %v829, 1
        %v831 = vsel %vm830, %v828, 0.0
        %v832 = vpack.c.bf16 %v831, %v831
        %v833 = vld [vmem:[%s7] sm:$0xf]
        %v834 = vld [vmem:[%s7 + $0x4] sm:$0xf]
        %v835 = vpack.c.bf16 %v825, %v825
        %s836 = scalar_lea.vmem %s7, 8
        %v837 = vld [vmem:[%s836] sm:$0xf]
        %v838 = vld [vmem:[%s836 + $0x4] sm:$0xf]
        %v841 = vunpack.c.l.b16 %v837
        %v842 = vunpack.c.l.b16 %v838
        %v843 = vpack.c.b16 %v842, %v841
        %v845 = vsel %vm670, %v843, 0
        %v848 = vsel %vm674, %v835, 0
        %850 = vmatprep.subr.bf16.mxu0 0
        %851 = vmatpush1.bf16.msra.mxu0 %v848
        %852 = vmatprep.subr.bf16.mxu0 0
        %853 = vmatpush1.bf16.msra.mxu0 0
        %854 = vmatprep.subr.bf16.mxu0 0
        %855 = vmatpush1.bf16.msra.mxu0 0
        %856 = vmatprep.subr.bf16.mxu0 0
        %857 = vmatpush1.bf16.msra.mxu0 0
        %858 = vmatprep.subr.bf16.mxu0 0
        %859 = vmatpush1.bf16.msra.mxu0 0
        %860 = vmatprep.subr.bf16.mxu0 0
        %861 = vmatpush1.bf16.msra.mxu0 0
        %862 = vmatprep.subr.bf16.mxu0 0
        %863 = vmatpush1.bf16.msra.mxu0 0
        %864 = vmatprep.subr.bf16.mxu0 0
        %865 = vmatpush1.bf16.msra.mxu0 0
        %866 = vmatprep.subr.bf16.mxu0 0
        %867 = vmatpush1.bf16.msra.mxu0 0
        %868 = vmatprep.subr.bf16.mxu0 0
        %869 = vmatpush1.bf16.msra.mxu0 0
        %870 = vmatprep.subr.bf16.mxu0 0
        %871 = vmatpush1.bf16.msra.mxu0 0
        %872 = vmatprep.subr.bf16.mxu0 0
        %873 = vmatpush1.bf16.msra.mxu0 0
        %874 = vmatprep.subr.bf16.mxu0 0
        %875 = vmatpush1.bf16.msra.mxu0 0
        %876 = vmatprep.subr.bf16.mxu0 0
        %877 = vmatpush1.bf16.msra.mxu0 0
        %878 = vmatprep.subr.bf16.mxu0 0
        %879 = vmatpush1.bf16.msra.mxu0 0
        %880 = vmatprep.subr.bf16.mxu0 0
        %881 = vmatpush1.bf16.msra.mxu0 0
        %882 = vmatprep.mubr.bf16.mxu0 0
        %883 = vmatmul.mubr.bf16.gmra.mrb[0].mxu0 %v845
        %v884 = vpop.f32.mrb[0].mxu0
        %v885 = vadd.f32 0.0, %v884
        %v886 = vpop.f32.mrb[0].mxu0
        %v887 = vpop.f32.mrb[0].mxu0
        %v888 = vadd.f32 0.0, %v887
        %v889 = vpop.f32.mrb[0].mxu0
        %890 = vdwg.mxu0
        %v893 = vunpack.c.l.b16 %v833
        %v894 = vunpack.c.l.b16 %v834
        %v895 = vpack.c.b16 %v894, %v893
        %v897 = vsel %vm670, %v895, 0
        %v900 = vsel %vm674, %v832, 0
        %902 = vmatprep.subr.bf16.mxu0 0
        %903 = vmatpush1.bf16.msra.mxu0 %v900
        %904 = vmatprep.subr.bf16.mxu0 0
        %905 = vmatpush1.bf16.msra.mxu0 0
        %906 = vmatprep.subr.bf16.mxu0 0
        %907 = vmatpush1.bf16.msra.mxu0 0
        %908 = vmatprep.subr.bf16.mxu0 0
        %909 = vmatpush1.bf16.msra.mxu0 0
        %910 = vmatprep.subr.bf16.mxu0 0
        %911 = vmatpush1.bf16.msra.mxu0 0
        %912 = vmatprep.subr.bf16.mxu0 0
        %913 = vmatpush1.bf16.msra.mxu0 0
        %914 = vmatprep.subr.bf16.mxu0 0
        %915 = vmatpush1.bf16.msra.mxu0 0
        %916 = vmatprep.subr.bf16.mxu0 0
        %917 = vmatpush1.bf16.msra.mxu0 0
        %918 = vmatprep.subr.bf16.mxu0 0
        %919 = vmatpush1.bf16.msra.mxu0 0
        %920 = vmatprep.subr.bf16.mxu0 0
        %921 = vmatpush1.bf16.msra.mxu0 0
        %922 = vmatprep.subr.bf16.mxu0 0
        %923 = vmatpush1.bf16.msra.mxu0 0
        %924 = vmatprep.subr.bf16.mxu0 0
        %925 = vmatpush1.bf16.msra.mxu0 0
        %926 = vmatprep.subr.bf16.mxu0 0
        %927 = vmatpush1.bf16.msra.mxu0 0
        %928 = vmatprep.subr.bf16.mxu0 0
        %929 = vmatpush1.bf16.msra.mxu0 0
        %930 = vmatprep.subr.bf16.mxu0 0
        %931 = vmatpush1.bf16.msra.mxu0 0
        %932 = vmatprep.subr.bf16.mxu0 0
        %933 = vmatpush1.bf16.msra.mxu0 0
        %934 = vmatprep.mubr.bf16.mxu0 0
        %935 = vmatmul.mubr.bf16.gmra.mrb[0].mxu0 %v897
        %v936 = vpop.f32.mrb[0].mxu0
        %v937 = vadd.f32 %v885, %v936
        %v938 = vpop.f32.mrb[0].mxu0
        %v939 = vpop.f32.mrb[0].mxu0
        %v940 = vadd.f32 %v888, %v939
        %v941 = vpop.f32.mrb[0].mxu0
        %942 = vdwg.mxu0
        %v943 = vld [vmem:[%s8] sm:$0xff]
        %v944 = vld [vmem:[%s8 + $0x8] sm:$0xff]
        %946 = vset.pattern.permute.xlu0 0
        %947 = vperm.xlu0 %946, %v943
        %v948 = vpop.permute.xlu0 %947
        %951 = vset.pattern.permute.xlu0 0
        %952 = vperm.xlu0 %951, %v944
        %v953 = vpop.permute.xlu0 %952
        %v955 = vadd.f32 %v937, %v948
        %v956 = vadd.f32 %v940, %v953
        %v957 = vmul.f32 %v955, 0.01
        %v958 = vmul.f32 %v956, 0.01
        %v959 = vmax.f32 %v955, %v957
        %v960 = vmax.f32 %v956, %v958
        %961 = vrot.lane.b32.xlu0 %v959, 2
        %v962 = vpop.permute.xlu0 %961
        %963 = vrot.lane.b32.xlu0 %v960, 2
        %v964 = vpop.permute.xlu0 %963
        %v965 = vsel %vm830, %v962, 0.0
        %v966 = vsel %vm830, %v964, 0.0
        %v967 = vpack.c.bf16 %v966, %v965
        %v968 = vld [vmem:[%s9] sm:$0xf]
        %v969 = vld [vmem:[%s9 + $0x4] sm:$0xf]
        %v970 = vpack.c.bf16 %v960, %v959
        %s971 = scalar_lea.vmem %s9, 8
        %v972 = vld [vmem:[%s971] sm:$0xf]
        %v973 = vld [vmem:[%s971 + $0x4] sm:$0xf]
        %v976 = vunpack.c.l.b16 %v972
        %v977 = vunpack.c.l.b16 %v973
        %v978 = vpack.c.b16 %v977, %v976
        %vm979 = vcmask 130048
        %v981 = vsel %vm979, %v978, 0
        %983 = vmatprep.subr.bf16.mxu0 0
        %984 = vmatpush1.bf16.msra.mxu0 %v970
        %985 = vmatprep.subr.bf16.mxu0 0
        %986 = vmatpush1.bf16.msra.mxu0 0
        %987 = vmatprep.subr.bf16.mxu0 0
        %988 = vmatpush1.bf16.msra.mxu0 0
        %989 = vmatprep.subr.bf16.mxu0 0
        %990 = vmatpush1.bf16.msra.mxu0 0
        %991 = vmatprep.subr.bf16.mxu0 0
        %992 = vmatpush1.bf16.msra.mxu0 0
        %993 = vmatprep.subr.bf16.mxu0 0
        %994 = vmatpush1.bf16.msra.mxu0 0
        %995 = vmatprep.subr.bf16.mxu0 0
        %996 = vmatpush1.bf16.msra.mxu0 0
        %997 = vmatprep.subr.bf16.mxu0 0
        %998 = vmatpush1.bf16.msra.mxu0 0
        %999 = vmatprep.subr.bf16.mxu0 0
        %1000 = vmatpush1.bf16.msra.mxu0 0
        %1001 = vmatprep.subr.bf16.mxu0 0
        %1002 = vmatpush1.bf16.msra.mxu0 0
        %1003 = vmatprep.subr.bf16.mxu0 0
        %1004 = vmatpush1.bf16.msra.mxu0 0
        %1005 = vmatprep.subr.bf16.mxu0 0
        %1006 = vmatpush1.bf16.msra.mxu0 0
        %1007 = vmatprep.subr.bf16.mxu0 0
        %1008 = vmatpush1.bf16.msra.mxu0 0
        %1009 = vmatprep.subr.bf16.mxu0 0
        %1010 = vmatpush1.bf16.msra.mxu0 0
        %1011 = vmatprep.subr.bf16.mxu0 0
        %1012 = vmatpush1.bf16.msra.mxu0 0
        %1013 = vmatprep.subr.bf16.mxu0 0
        %1014 = vmatpush1.bf16.msra.mxu0 0
        %1015 = vmatprep.mubr.bf16.mxu0 0
        %1016 = vmatmul.mubr.bf16.gmra.mrb[0].mxu0 %v981
        %v1017 = vpop.f32.mrb[0].mxu0
        %v1018 = vadd.f32 0.0, %v1017
        %v1019 = vpop.f32.mrb[0].mxu0
        %v1020 = vpop.f32.mrb[0].mxu0
        %v1021 = vadd.f32 0.0, %v1020
        %v1022 = vpop.f32.mrb[0].mxu0
        %1023 = vdwg.mxu0
        %v1026 = vunpack.c.l.b16 %v968
        %v1027 = vunpack.c.l.b16 %v969
        %v1028 = vpack.c.b16 %v1027, %v1026
        %v1030 = vsel %vm979, %v1028, 0
        %1032 = vmatprep.subr.bf16.mxu0 0
        %1033 = vmatpush1.bf16.msra.mxu0 %v967
        %1034 = vmatprep.subr.bf16.mxu0 0
        %1035 = vmatpush1.bf16.msra.mxu0 0
        %1036 = vmatprep.subr.bf16.mxu0 0
        %1037 = vmatpush1.bf16.msra.mxu0 0
        %1038 = vmatprep.subr.bf16.mxu0 0
        %1039 = vmatpush1.bf16.msra.mxu0 0
        %1040 = vmatprep.subr.bf16.mxu0 0
        %1041 = vmatpush1.bf16.msra.mxu0 0
        %1042 = vmatprep.subr.bf16.mxu0 0
        %1043 = vmatpush1.bf16.msra.mxu0 0
        %1044 = vmatprep.subr.bf16.mxu0 0
        %1045 = vmatpush1.bf16.msra.mxu0 0
        %1046 = vmatprep.subr.bf16.mxu0 0
        %1047 = vmatpush1.bf16.msra.mxu0 0
        %1048 = vmatprep.subr.bf16.mxu0 0
        %1049 = vmatpush1.bf16.msra.mxu0 0
        %1050 = vmatprep.subr.bf16.mxu0 0
        %1051 = vmatpush1.bf16.msra.mxu0 0
        %1052 = vmatprep.subr.bf16.mxu0 0
        %1053 = vmatpush1.bf16.msra.mxu0 0
        %1054 = vmatprep.subr.bf16.mxu0 0
        %1055 = vmatpush1.bf16.msra.mxu0 0
        %1056 = vmatprep.subr.bf16.mxu0 0
        %1057 = vmatpush1.bf16.msra.mxu0 0
        %1058 = vmatprep.subr.bf16.mxu0 0
        %1059 = vmatpush1.bf16.msra.mxu0 0
        %1060 = vmatprep.subr.bf16.mxu0 0
        %1061 = vmatpush1.bf16.msra.mxu0 0
        %1062 = vmatprep.subr.bf16.mxu0 0
        %1063 = vmatpush1.bf16.msra.mxu0 0
        %1064 = vmatprep.mubr.bf16.mxu0 0
        %1065 = vmatmul.mubr.bf16.gmra.mrb[0].mxu0 %v1030
        %v1066 = vpop.f32.mrb[0].mxu0
        %v1067 = vadd.f32 %v1018, %v1066
        %v1068 = vpop.f32.mrb[0].mxu0
        %v1069 = vpop.f32.mrb[0].mxu0
        %v1070 = vadd.f32 %v1021, %v1069
        %v1071 = vpop.f32.mrb[0].mxu0
        %1072 = vdwg.mxu0
        %v1073 = vld [vmem:[%s10] sm:$0xff]
        %v1074 = vld [vmem:[%s10 + $0x8] sm:$0xff]
        %1076 = vset.pattern.permute.xlu0 0
        %1077 = vperm.xlu0 %1076, %v1073
        %v1078 = vpop.permute.xlu0 %1077
        %1081 = vset.pattern.permute.xlu0 0
        %1082 = vperm.xlu0 %1081, %v1074
        %v1083 = vpop.permute.xlu0 %1082
        %v1085 = vadd.f32 %v1067, %v1078
        %v1086 = vadd.f32 %v1070, %v1083
        %v1087 = vmul.f32 %v1085, 0.01
        %v1088 = vmul.f32 %v1086, 0.01
        %v1089 = vmax.f32 %v1085, %v1087
        %v1090 = vmax.f32 %v1086, %v1088
        %v1091 = vld [vmem:[%s11] sm:$0xf]
        %v1092 = vld [vmem:[%s11 + $0x4] sm:$0xf]
        %v1093 = vld [vmem:[%s12] sm:$0xff]
        %v1094 = vld [vmem:[%s12 + $0x8] sm:$0xff]
        %1096 = vset.pattern.permute.xlu0 0
        %1097 = vperm.xlu0 %1096, %v1093
        %v1098 = vpop.permute.xlu0 %1097
        %1101 = vset.pattern.permute.xlu0 0
        %1102 = vperm.xlu0 %1101, %v1094
        %v1103 = vpop.permute.xlu0 %1102
        %v1107 = vunpack.c.l.b16 %v1091
        %v1108 = vunpack.c.l.b16 %v1092
        %v1109 = vpack.c.b16 %v1108, %v1107
        %v1111 = vsel %vm670, %v1109, 0
        %1113 = vmatprep.subr.bf16.mxu0 0
        %1114 = vmatpush1.bf16.msra.mxu0 %v848
        %1115 = vmatprep.subr.bf16.mxu0 0
        %1116 = vmatpush1.bf16.msra.mxu0 0
        %1117 = vmatprep.subr.bf16.mxu0 0
        %1118 = vmatpush1.bf16.msra.mxu0 0
        %1119 = vmatprep.subr.bf16.mxu0 0
        %1120 = vmatpush1.bf16.msra.mxu0 0
        %1121 = vmatprep.subr.bf16.mxu0 0
        %1122 = vmatpush1.bf16.msra.mxu0 0
        %1123 = vmatprep.subr.bf16.mxu0 0
        %1124 = vmatpush1.bf16.msra.mxu0 0
        %1125 = vmatprep.subr.bf16.mxu0 0
        %1126 = vmatpush1.bf16.msra.mxu0 0
        %1127 = vmatprep.subr.bf16.mxu0 0
        %1128 = vmatpush1.bf16.msra.mxu0 0
        %1129 = vmatprep.subr.bf16.mxu0 0
        %1130 = vmatpush1.bf16.msra.mxu0 0
        %1131 = vmatprep.subr.bf16.mxu0 0
        %1132 = vmatpush1.bf16.msra.mxu0 0
        %1133 = vmatprep.subr.bf16.mxu0 0
        %1134 = vmatpush1.bf16.msra.mxu0 0
        %1135 = vmatprep.subr.bf16.mxu0 0
        %1136 = vmatpush1.bf16.msra.mxu0 0
        %1137 = vmatprep.subr.bf16.mxu0 0
        %1138 = vmatpush1.bf16.msra.mxu0 0
        %1139 = vmatprep.subr.bf16.mxu0 0
        %1140 = vmatpush1.bf16.msra.mxu0 0
        %1141 = vmatprep.subr.bf16.mxu0 0
        %1142 = vmatpush1.bf16.msra.mxu0 0
        %1143 = vmatprep.subr.bf16.mxu0 0
        %1144 = vmatpush1.bf16.msra.mxu0 0
        %1145 = vmatprep.mubr.bf16.mxu0 0
        %1146 = vmatmul.mubr.bf16.gmra.mrb[0].mxu0 %v1111
        %v1147 = vpop.f32.mrb[0].mxu0
        %v1148 = vadd.f32 %v1098, %v1147
        %v1149 = vpop.f32.mrb[0].mxu0
        %v1150 = vpop.f32.mrb[0].mxu0
        %v1151 = vadd.f32 %v1103, %v1150
        %v1152 = vpop.f32.mrb[0].mxu0
        %1153 = vdwg.mxu0
        %v1154 = vadd.f32 %v1089, %v1148
        %v1155 = vadd.f32 %v1090, %v1151
        %v1156 = vmul.f32 %v1154, 0.01
        %v1157 = vmul.f32 %v1155, 0.01
        %v1158 = vmax.f32 %v1154, %v1156
        %v1159 = vmax.f32 %v1155, %v1157
        %vm1160 = vcmp.ge.s32.totalorder %v546, 4
        %1161 = vrot.lane.b32.xlu0 %v1158, 4
        %v1162 = vpop.permute.xlu0 %1161
        %1163 = vrot.lane.b32.xlu0 %v1159, 4
        %v1164 = vpop.permute.xlu0 %1163
        %v1165 = vsel %vm1160, 1, 0
        %vm1166 = vcmp.eq.s32.totalorder %v1165, 1
        %v1167 = vsel %vm1166, %v1162, 0.0
        %v1168 = vsel %vm1166, %v1164, 0.0
        %v1169 = vpack.c.bf16 %v1168, %v1167
        %v1170 = vld [vmem:[%s13] sm:$0xf]
        %v1171 = vld [vmem:[%s13 + $0x4] sm:$0xf]
        %v1172 = vpack.c.bf16 %v1159, %v1158
        %s1173 = scalar_lea.vmem %s13, 8
        %v1174 = vld [vmem:[%s1173] sm:$0xf]
        %v1175 = vld [vmem:[%s1173 + $0x4] sm:$0xf]
        %v1178 = vunpack.c.l.b16 %v1174
        %v1179 = vunpack.c.l.b16 %v1175
        %v1180 = vpack.c.b16 %v1179, %v1178
        %v1182 = vsel %vm979, %v1180, 0
        %1184 = vmatprep.subr.bf16.mxu0 0
        %1185 = vmatpush1.bf16.msra.mxu0 %v1172
        %1186 = vmatprep.subr.bf16.mxu0 0
        %1187 = vmatpush1.bf16.msra.mxu0 0
        %1188 = vmatprep.subr.bf16.mxu0 0
        %1189 = vmatpush1.bf16.msra.mxu0 0
        %1190 = vmatprep.subr.bf16.mxu0 0
        %1191 = vmatpush1.bf16.msra.mxu0 0
        %1192 = vmatprep.subr.bf16.mxu0 0
        %1193 = vmatpush1.bf16.msra.mxu0 0
        %1194 = vmatprep.subr.bf16.mxu0 0
        %1195 = vmatpush1.bf16.msra.mxu0 0
        %1196 = vmatprep.subr.bf16.mxu0 0
        %1197 = vmatpush1.bf16.msra.mxu0 0
        %1198 = vmatprep.subr.bf16.mxu0 0
        %1199 = vmatpush1.bf16.msra.mxu0 0
        %1200 = vmatprep.subr.bf16.mxu0 0
        %1201 = vmatpush1.bf16.msra.mxu0 0
        %1202 = vmatprep.subr.bf16.mxu0 0
        %1203 = vmatpush1.bf16.msra.mxu0 0
        %1204 = vmatprep.subr.bf16.mxu0 0
        %1205 = vmatpush1.bf16.msra.mxu0 0
        %1206 = vmatprep.subr.bf16.mxu0 0
        %1207 = vmatpush1.bf16.msra.mxu0 0
        %1208 = vmatprep.subr.bf16.mxu0 0
        %1209 = vmatpush1.bf16.msra.mxu0 0
        %1210 = vmatprep.subr.bf16.mxu0 0
        %1211 = vmatpush1.bf16.msra.mxu0 0
        %1212 = vmatprep.subr.bf16.mxu0 0
        %1213 = vmatpush1.bf16.msra.mxu0 0
        %1214 = vmatprep.subr.bf16.mxu0 0
        %1215 = vmatpush1.bf16.msra.mxu0 0
        %1216 = vmatprep.mubr.bf16.mxu0 0
        %1217 = vmatmul.mubr.bf16.gmra.mrb[0].mxu0 %v1182
        %v1218 = vpop.f32.mrb[0].mxu0
        %v1219 = vadd.f32 0.0, %v1218
        %v1220 = vpop.f32.mrb[0].mxu0
        %v1221 = vpop.f32.mrb[0].mxu0
        %v1222 = vadd.f32 0.0, %v1221
        %v1223 = vpop.f32.mrb[0].mxu0
        %1224 = vdwg.mxu0
        %v1227 = vunpack.c.l.b16 %v1170
        %v1228 = vunpack.c.l.b16 %v1171
        %v1229 = vpack.c.b16 %v1228, %v1227
        %v1231 = vsel %vm979, %v1229, 0
        %1233 = vmatprep.subr.bf16.mxu0 0
        %1234 = vmatpush1.bf16.msra.mxu0 %v1169
        %1235 = vmatprep.subr.bf16.mxu0 0
        %1236 = vmatpush1.bf16.msra.mxu0 0
        %1237 = vmatprep.subr.bf16.mxu0 0
        %1238 = vmatpush1.bf16.msra.mxu0 0
        %1239 = vmatprep.subr.bf16.mxu0 0
        %1240 = vmatpush1.bf16.msra.mxu0 0
        %1241 = vmatprep.subr.bf16.mxu0 0
        %1242 = vmatpush1.bf16.msra.mxu0 0
        %1243 = vmatprep.subr.bf16.mxu0 0
        %1244 = vmatpush1.bf16.msra.mxu0 0
        %1245 = vmatprep.subr.bf16.mxu0 0
        %1246 = vmatpush1.bf16.msra.mxu0 0
        %1247 = vmatprep.subr.bf16.mxu0 0
        %1248 = vmatpush1.bf16.msra.mxu0 0
        %1249 = vmatprep.subr.bf16.mxu0 0
        %1250 = vmatpush1.bf16.msra.mxu0 0
        %1251 = vmatprep.subr.bf16.mxu0 0
        %1252 = vmatpush1.bf16.msra.mxu0 0
        %1253 = vmatprep.subr.bf16.mxu0 0
        %1254 = vmatpush1.bf16.msra.mxu0 0
        %1255 = vmatprep.subr.bf16.mxu0 0
        %1256 = vmatpush1.bf16.msra.mxu0 0
        %1257 = vmatprep.subr.bf16.mxu0 0
        %1258 = vmatpush1.bf16.msra.mxu0 0
        %1259 = vmatprep.subr.bf16.mxu0 0
        %1260 = vmatpush1.bf16.msra.mxu0 0
        %1261 = vmatprep.subr.bf16.mxu0 0
        %1262 = vmatpush1.bf16.msra.mxu0 0
        %1263 = vmatprep.subr.bf16.mxu0 0
        %1264 = vmatpush1.bf16.msra.mxu0 0
        %1265 = vmatprep.mubr.bf16.mxu0 0
        %1266 = vmatmul.mubr.bf16.gmra.mrb[0].mxu0 %v1231
        %v1267 = vpop.f32.mrb[0].mxu0
        %v1268 = vadd.f32 %v1219, %v1267
        %v1269 = vpop.f32.mrb[0].mxu0
        %v1270 = vpop.f32.mrb[0].mxu0
        %v1271 = vadd.f32 %v1222, %v1270
        %v1272 = vpop.f32.mrb[0].mxu0
        %1273 = vdwg.mxu0
        %v1274 = vld [vmem:[%s14] sm:$0xff]
        %v1275 = vld [vmem:[%s14 + $0x8] sm:$0xff]
        %1277 = vset.pattern.permute.xlu0 0
        %1278 = vperm.xlu0 %1277, %v1274
        %v1279 = vpop.permute.xlu0 %1278
        %1282 = vset.pattern.permute.xlu0 0
        %1283 = vperm.xlu0 %1282, %v1275
        %v1284 = vpop.permute.xlu0 %1283
        %v1286 = vadd.f32 %v1268, %v1279
        %v1287 = vadd.f32 %v1271, %v1284
        %v1288 = vmul.f32 %v1286, 0.01
        %v1289 = vmul.f32 %v1287, 0.01
        %v1290 = vmax.f32 %v1286, %v1288
        %v1291 = vmax.f32 %v1287, %v1289
        %1292 = vrot.lane.b32.xlu0 %v1290, 4
        %v1293 = vpop.permute.xlu0 %1292
        %1294 = vrot.lane.b32.xlu0 %v1291, 4
        %v1295 = vpop.permute.xlu0 %1294
        %v1296 = vsel %vm1166, %v1293, 0.0
        %v1297 = vsel %vm1166, %v1295, 0.0
        %v1298 = vpack.c.bf16 %v1297, %v1296
        %v1299 = vld [vmem:[%s15] sm:$0xf]
        %v1300 = vld [vmem:[%s15 + $0x4] sm:$0xf]
        %v1301 = vpack.c.bf16 %v1291, %v1290
        %s1302 = scalar_lea.vmem %s15, 8
        %v1303 = vld [vmem:[%s1302] sm:$0xf]
        %v1304 = vld [vmem:[%s1302 + $0x4] sm:$0xf]
        %v1307 = vunpack.c.l.b16 %v1303
        %v1308 = vunpack.c.l.b16 %v1304
        %v1309 = vpack.c.b16 %v1308, %v1307
        %v1311 = vsel %vm979, %v1309, 0
        %1313 = vmatprep.subr.bf16.mxu0 0
        %1314 = vmatpush1.bf16.msra.mxu0 %v1301
        %1315 = vmatprep.subr.bf16.mxu0 0
        %1316 = vmatpush1.bf16.msra.mxu0 0
        %1317 = vmatprep.subr.bf16.mxu0 0
        %1318 = vmatpush1.bf16.msra.mxu0 0
        %1319 = vmatprep.subr.bf16.mxu0 0
        %1320 = vmatpush1.bf16.msra.mxu0 0
        %1321 = vmatprep.subr.bf16.mxu0 0
        %1322 = vmatpush1.bf16.msra.mxu0 0
        %1323 = vmatprep.subr.bf16.mxu0 0
        %1324 = vmatpush1.bf16.msra.mxu0 0
        %1325 = vmatprep.subr.bf16.mxu0 0
        %1326 = vmatpush1.bf16.msra.mxu0 0
        %1327 = vmatprep.subr.bf16.mxu0 0
        %1328 = vmatpush1.bf16.msra.mxu0 0
        %1329 = vmatprep.subr.bf16.mxu0 0
        %1330 = vmatpush1.bf16.msra.mxu0 0
        %1331 = vmatprep.subr.bf16.mxu0 0
        %1332 = vmatpush1.bf16.msra.mxu0 0
        %1333 = vmatprep.subr.bf16.mxu0 0
        %1334 = vmatpush1.bf16.msra.mxu0 0
        %1335 = vmatprep.subr.bf16.mxu0 0
        %1336 = vmatpush1.bf16.msra.mxu0 0
        %1337 = vmatprep.subr.bf16.mxu0 0
        %1338 = vmatpush1.bf16.msra.mxu0 0
        %1339 = vmatprep.subr.bf16.mxu0 0
        %1340 = vmatpush1.bf16.msra.mxu0 0
        %1341 = vmatprep.subr.bf16.mxu0 0
        %1342 = vmatpush1.bf16.msra.mxu0 0
        %1343 = vmatprep.subr.bf16.mxu0 0
        %1344 = vmatpush1.bf16.msra.mxu0 0
        %1345 = vmatprep.mubr.bf16.mxu0 0
        %1346 = vmatmul.mubr.bf16.gmra.mrb[0].mxu0 %v1311
        %v1347 = vpop.f32.mrb[0].mxu0
        %v1348 = vadd.f32 0.0, %v1347
        %v1349 = vpop.f32.mrb[0].mxu0
        %v1350 = vpop.f32.mrb[0].mxu0
        %v1351 = vadd.f32 0.0, %v1350
        %v1352 = vpop.f32.mrb[0].mxu0
        %1353 = vdwg.mxu0
        %v1356 = vunpack.c.l.b16 %v1299
        %v1357 = vunpack.c.l.b16 %v1300
        %v1358 = vpack.c.b16 %v1357, %v1356
        %v1360 = vsel %vm979, %v1358, 0
        %1362 = vmatprep.subr.bf16.mxu0 0
        %1363 = vmatpush1.bf16.msra.mxu0 %v1298
        %1364 = vmatprep.subr.bf16.mxu0 0
        %1365 = vmatpush1.bf16.msra.mxu0 0
        %1366 = vmatprep.subr.bf16.mxu0 0
        %1367 = vmatpush1.bf16.msra.mxu0 0
        %1368 = vmatprep.subr.bf16.mxu0 0
        %1369 = vmatpush1.bf16.msra.mxu0 0
        %1370 = vmatprep.subr.bf16.mxu0 0
        %1371 = vmatpush1.bf16.msra.mxu0 0
        %1372 = vmatprep.subr.bf16.mxu0 0
        %1373 = vmatpush1.bf16.msra.mxu0 0
        %1374 = vmatprep.subr.bf16.mxu0 0
        %1375 = vmatpush1.bf16.msra.mxu0 0
        %1376 = vmatprep.subr.bf16.mxu0 0
        %1377 = vmatpush1.bf16.msra.mxu0 0
        %1378 = vmatprep.subr.bf16.mxu0 0
        %1379 = vmatpush1.bf16.msra.mxu0 0
        %1380 = vmatprep.subr.bf16.mxu0 0
        %1381 = vmatpush1.bf16.msra.mxu0 0
        %1382 = vmatprep.subr.bf16.mxu0 0
        %1383 = vmatpush1.bf16.msra.mxu0 0
        %1384 = vmatprep.subr.bf16.mxu0 0
        %1385 = vmatpush1.bf16.msra.mxu0 0
        %1386 = vmatprep.subr.bf16.mxu0 0
        %1387 = vmatpush1.bf16.msra.mxu0 0
        %1388 = vmatprep.subr.bf16.mxu0 0
        %1389 = vmatpush1.bf16.msra.mxu0 0
        %1390 = vmatprep.subr.bf16.mxu0 0
        %1391 = vmatpush1.bf16.msra.mxu0 0
        %1392 = vmatprep.subr.bf16.mxu0 0
        %1393 = vmatpush1.bf16.msra.mxu0 0
        %1394 = vmatprep.mubr.bf16.mxu0 0
        %1395 = vmatmul.mubr.bf16.gmra.mrb[0].mxu0 %v1360
        %v1396 = vpop.f32.mrb[0].mxu0
        %v1397 = vadd.f32 %v1348, %v1396
        %v1398 = vpop.f32.mrb[0].mxu0
        %v1399 = vpop.f32.mrb[0].mxu0
        %v1400 = vadd.f32 %v1351, %v1399
        %v1401 = vpop.f32.mrb[0].mxu0
        %1402 = vdwg.mxu0
        %v1403 = vld [vmem:[%s16] sm:$0xff]
        %v1404 = vld [vmem:[%s16 + $0x8] sm:$0xff]
        %1406 = vset.pattern.permute.xlu0 0
        %1407 = vperm.xlu0 %1406, %v1403
        %v1408 = vpop.permute.xlu0 %1407
        %1411 = vset.pattern.permute.xlu0 0
        %1412 = vperm.xlu0 %1411, %v1404
        %v1413 = vpop.permute.xlu0 %1412
        %v1415 = vadd.f32 %v1397, %v1408
        %v1416 = vadd.f32 %v1400, %v1413
        %v1417 = vmul.f32 %v1415, 0.01
        %v1418 = vmul.f32 %v1416, 0.01
        %v1419 = vmax.f32 %v1415, %v1417
        %v1420 = vmax.f32 %v1416, %v1418
        %v1421 = vadd.f32 %v1419, %v1158
        %v1422 = vadd.f32 %v1420, %v1159
        %v1423 = vmul.f32 %v1421, 0.01
        %v1424 = vmul.f32 %v1422, 0.01
        %v1425 = vmax.f32 %v1421, %v1423
        %v1426 = vmax.f32 %v1422, %v1424
        %1427 = vst [vmem:[%s539] sm:$0xff] %v1425
        %1428 = vst [vmem:[%s539 + $0x8] sm:$0xff] %v1426
        %s1429 = sand.u32 %s401, 1
        %s1430 = scalar_lea.sflag [#allocation3], %s1429
        %s1431 = sand.u32 %s401, 1
        %s1432 = smul.addr %s1431, 16
        %s1433 = scalar_lea.vmem [#allocation2], %s1432
        // Predicated region
        $region89: #{tpu_custom_call.1} parent=87 // pred_check
          %p1434 = pneg %p411
        $region90: #{tpu_custom_call.1} parent=87 // pred_check_branch
          %1436 = sbr.rel (%p1434) target = $region92
        $region91: #{tpu_custom_call.1} parent=87 // pred_region
          %s1438 = ssub.s32 256, 256
          %1439 = vsyncadd %s1430, %s1438
          %s1440 = smul.addr %s31, 2
          %s1441 = smul.addr %s1440, 128
          %s1442 = scalar_lea.hbm %s17, %s1441
          %s1443 = sshll.u32 %s1433, 4
          %s1444 = int_to_ptr.vmem [resolvable:$true] %s1443
          %1449 = dma.vmem_to_hbm [thread:$0]  %s1444, 256, %s1442, %s1430, 128, 128, 8
        $region92: #{tpu_custom_call.1} parent=87 // pred_fallthru
          _
      $region88: #{tpu_custom_call.1} parent=5 // pred_fallthru
        _
      %p1450 = scmp.le.s32.totalorder 2, %s26
      // Predicated region
      $region93: #{tpu_custom_call.1} parent=5 // pred_check
        %p1451 = pneg %p1450
      $region94: #{tpu_custom_call.1} parent=5 // pred_check_branch
        %1453 = sbr.rel (%p1451) target = $region96
      $region95: #{tpu_custom_call.1} parent=5 // pred_region
        %s1454 = ssub.s32 %s26, 2
        // Predicated region
        $region97: #{tpu_custom_call.1} parent=95 // pred_check
          %p1455 = pneg %p417
        $region98: #{tpu_custom_call.1} parent=95 // pred_check_branch
          %1457 = sbr.rel (%p1455) target = $region100
        $region99: #{tpu_custom_call.1} parent=95 // pred_region
          %s1458 = sand.u32 %s402, 1
          %s1459 = scalar_lea.sflag [#allocation3], %s1458
          %s1460 = sand.u32 %s402, 1
          %s1461 = smul.addr %s1460, 16
          %s1462 = scalar_lea.vmem [#allocation2], %s1461
          %1463 = dma.done %s1459, 256
        $region100: #{tpu_custom_call.1} parent=95 // pred_fallthru
          _
      $region96: #{tpu_custom_call.1} parent=5 // pred_fallthru
        _
    $region6: #{tpu_custom_call.1} parent=1 // loop_footer
      %s30 = sadd.s32 1, %s26
    $region7: #{tpu_custom_call.1} parent=1 // loop_footer_branch
      %25 = sbr.rel target = $region3
    $region8: #{tpu_custom_call.1} parent=1 // loop_exit
      _
    %1464 = vsyncpa [#allocation3], 1
    %s1465 = scalar_lea.sflag [#allocation3], 1
    %1466 = vsyncpa %s1465, 1

</llo_original>
